<compile_context>
chip_gen: v6e
topology: v6e:2x2x1
jax: 0.10.0
libtpu: 0.0.40
codegen_flags: <defaults>
</compile_context>

<pallas_src>
import jax
import jax.numpy as jnp
from jax.experimental import pallas as pl
from jax.experimental.pallas import tpu as pltpu


def _round_up(x, m):
    return ((x + m - 1) // m) * m


def _tpu_generation_limits():
    """(max_batch_tile, min_grid_steps, vmem_cap_bytes) per TPU generation."""
    try:
        kind = jax.devices()[0].device_kind.lower()
    except Exception:  # pragma: no cover - defensive
        kind = ""
    if "v7" in kind:
        # 64 MiB physical VMEM, 2 TensorCores -> want >=2 steps per core.
        return 2048, 4, 48 << 20
    if "v6" in kind:
        # 128 MiB physical VMEM, fast MXU -> bigger tiles amortise step overhead.
        return 4096, 2, 64 << 20
    if "v5e" in kind or "v5 lite" in kind or "v5litepod" in kind:
        # 16 MiB scoped default; keep the tile modest and raise the limit a bit.
        return 1024, 2, 48 << 20
    return 1024, 2, 32 << 20  # conservative default (unknown / other chips)


def _choose_batch_tile(B, max_tile, min_steps):
    """Largest MXU-friendly tile leaving >= min_steps grid steps; small batches
    use a single full-extent block (no padding, no per-step overhead)."""
    for tile in (4096, 2048, 1024, 512, 256, 128):
        if tile <= max_tile and B >= min_steps * tile:
            return tile
    return B  # full-extent single block (always legal: block dim == array dim)


def _vmem_limit_bytes(tile, cap):
    """Per-step working set: x tile (f32, lane-padded to 128) and bf16 out tile,
    both double-buffered, plus f32/bf16 intermediates and ~all weights."""
    x_buf = tile * 128 * 4 * 2
    out_buf = tile * 128 * 2 * 2
    inter = tile * (512 * 4 + 512 * 2 + 128 * 4 + 128 * 2 + 128 * 4 + 128 * 2 + 128 * 4)
    weights = 1 << 20  # all weights + biases, generous
    need = x_buf + out_buf + inter + weights
    return int(min(max(need * 5 // 4 + (2 << 20), 16 << 20), cap))


def mlp_kernel(x_ref,
               w1_ref, b1_ref,
               w2_ref, b2_ref,
               w3_ref, b3_ref,
               w4_ref, b4_ref,
               o_ref):
    # x arrives at its true feature width (f32); cast to bf16 for the MXU.
    x = x_ref[...].astype(jnp.bfloat16)
    # Layer 1 + ReLU  (bf16 operands, f32 MXU accumulation, f32 bias)
    h = jnp.dot(x, w1_ref[...], preferred_element_type=jnp.float32) + b1_ref[...]
    h = jnp.maximum(h, 0.0).astype(jnp.bfloat16)
    # Layer 2 + ReLU
    h = jnp.dot(h, w2_ref[...], preferred_element_type=jnp.float32) + b2_ref[...]
    h = jnp.maximum(h, 0.0).astype(jnp.bfloat16)
    # Layer 3 + ReLU (output padded 64 -> 128; padded cols are exactly zero)
    h = jnp.dot(h, w3_ref[...], preferred_element_type=jnp.float32) + b3_ref[...]
    h = jnp.maximum(h, 0.0).astype(jnp.bfloat16)
    # Output layer (no activation), lane-dense 128-wide bf16 store.
    out = jnp.dot(h, w4_ref[...], preferred_element_type=jnp.float32) + b4_ref[...]
    o_ref[...] = out.astype(o_ref.dtype)


def init_params(key, num_feature, num_class):
    """PyTorch nn.Linear-like init (uniform(-1/sqrt(fan_in), 1/sqrt(fan_in))).
    Weights stored as (in, out) so the kernel does plain x @ W + b."""
    dims = [(num_feature, 512), (512, 128), (128, 64), (64, num_class)]
    params = {}
    for idx, (din, dout) in enumerate(dims, start=1):
        key, kw, kb = jax.random.split(key, 3)
        bound = 1.0 / (din ** 0.5)
        params[f"w{idx}"] = jax.random.uniform(
            kw, (din, dout), jnp.float32, minval=-bound, maxval=bound)
        params[f"b{idx}"] = jax.random.uniform(
            kb, (1, dout), jnp.float32, minval=-bound, maxval=bound)
    return params


def prepare_params(params, num_feature, num_class):
    """One-time preprocessing: cast weights to bf16 (biases stay f32) and
    zero-pad only the small trailing dims that benefit from lane density
    (hidden 64 -> 128, num_class -> 128).  Padding is a mathematical no-op.
    The feature dim (K of layer 1) is left un-padded; MXU handles small K."""
    h3_pad = 128                          # 64  -> 128
    c_pad = _round_up(num_class, 128)     # 5   -> 128

    w3 = jnp.zeros((128, h3_pad), jnp.float32).at[:, :64].set(params["w3"])
    b3 = jnp.zeros((1, h3_pad), jnp.float32).at[:, :64].set(params["b3"])
    w4 = jnp.zeros((h3_pad, c_pad), jnp.float32).at[:64, :num_class].set(params["w4"])
    b4 = jnp.zeros((1, c_pad), jnp.float32).at[:, :num_class].set(params["b4"])

    return {
        "w1": params["w1"].astype(jnp.bfloat16),   "b1": params["b1"],
        "w2": params["w2"].astype(jnp.bfloat16),   "b2": params["b2"],
        "w3": w3.astype(jnp.bfloat16),             "b3": b3,
        "w4": w4.astype(jnp.bfloat16),             "b4": b4,
    }


def _weight_spec(shape, pipeline_mode):
    if pipeline_mode is None:
        return pl.BlockSpec(shape, lambda i: (0, 0))
    return pl.BlockSpec(shape, lambda i: (0, 0), pipeline_mode=pipeline_mode)


def multiclass_classification_forward(x, prepared, num_class, *,
                                      batch_tile=None, slice_output=True):
    """x: (B, num_feature) float32. prepared: output of prepare_params.

    Returns bf16 logits (B, num_class) (or the lane-padded (B, 128) block when
    slice_output=False, so downstream ops can consume it without another HBM pass).
    """
    B, num_feature = x.shape
    c_pad = prepared["w4"].shape[1]

    max_tile, min_steps, vmem_cap = _tpu_generation_limits()
    if batch_tile is None:
        batch_tile = _choose_batch_tile(B, max_tile, min_steps)
    grid = (pl.cdiv(B, batch_tile),)

    # True HBM traffic: un-padded x read, weights once, bf16 lane-padded output.
    flops = 2 * B * (num_feature * 512 + 512 * 128 + 128 * 128 + 128 * c_pad)
    bytes_accessed = (
        int(x.size) * x.dtype.itemsize
        + sum(int(v.size) * v.dtype.itemsize for v in prepared.values())
        + B * c_pad * 2)

    def build(weight_pipeline_mode):
        in_specs = [pl.BlockSpec((batch_tile, num_feature), lambda i: (i, 0))]  # x (tiled)
        for name in ("w1", "b1", "w2", "b2", "w3", "b3", "w4", "b4"):
            # Constant block index -> fetched once, VMEM-resident across all steps.
            in_specs.append(_weight_spec(prepared[name].shape, weight_pipeline_mode))
        out_spec = pl.BlockSpec((batch_tile, c_pad), lambda i: (i, 0))
        return pl.pallas_call(
            mlp_kernel,
            out_shape=jax.ShapeDtypeStruct((B, c_pad), jnp.bfloat16),
            grid_spec=pltpu.PrefetchScalarGridSpec(
                num_scalar_prefetch=0,
                grid=grid,
                in_specs=in_specs,
                out_specs=out_spec,
            ),
            compiler_params=pltpu.CompilerParams(
                dimension_semantics=("parallel",),   # batch axis: megacore/dual-TC
                vmem_limit_bytes=_vmem_limit_bytes(batch_tile, vmem_cap),
            ),
            cost_estimate=pl.CostEstimate(
                flops=flops, transcendentals=0, bytes_accessed=bytes_accessed),
        )

    args = (x,
            prepared["w1"], prepared["b1"],
            prepared["w2"], prepared["b2"],
            prepared["w3"], prepared["b3"],
            prepared["w4"], prepared["b4"])

    try:
        # Weights never change block index -> single-buffer them (VMEM headroom).
        out_padded = jax.block_until_ready(build(pl.Buffered(1))(*args))
    except Exception:
        # Fallback if this JAX build rejects pipeline_mode / Buffered(1).
        out_padded = jax.block_until_ready(build(None)(*args))

    if not slice_output:
        return out_padded
    # Kept only to honour the nn.Module (B, num_class) contract; fuse the
    # downstream softmax/argmax onto out_padded to avoid this extra HBM pass.
    return out_padded[:, :num_class]


def reference_forward(x, params):
    h = jnp.maximum(x @ params["w1"] + params["b1"], 0.0)
    h = jnp.maximum(h @ params["w2"] + params["b2"], 0.0)
    h = jnp.maximum(h @ params["w3"] + params["b3"], 0.0)
    return h @ params["w4"] + params["b4"]


if __name__ == "__main__":
    key = jax.random.PRNGKey(0)
    k_x, k_x2, k_p = jax.random.split(key, 3)

    num_feature = 12   # e.g. LTE handover feature vector size
    num_class = 5

    params = init_params(k_p, num_feature, num_class)
    prepared = prepare_params(params, num_feature, num_class)

    # Small demo batch: single full-extent block, no padding anywhere.
    x = jax.random.normal(k_x, (8, num_feature), jnp.float32)
    out = multiclass_classification_forward(x, prepared, num_class)
    out = jax.block_until_ready(out)
    ref = reference_forward(x, params)
    assert out.shape == (8, num_class)
    err = float(jnp.max(jnp.abs(out.astype(jnp.float32) - ref)))
    assert jnp.allclose(out.astype(jnp.float32), ref, atol=5e-2, rtol=5e-2), (
        f"small-batch mismatch vs reference (max abs err {err})")

    # Larger, non-divisible batch: tiled path (partial/clipped edge block).
    x2 = jax.random.normal(k_x2, (300, num_feature), jnp.float32)
    out2 = multiclass_classification_forward(x2, prepared, num_class)
    out2 = jax.block_until_ready(out2)
    ref2 = reference_forward(x2, params)
    assert out2.shape == (300, num_class)
    err2 = float(jnp.max(jnp.abs(out2.astype(jnp.float32) - ref2)))
    assert jnp.allclose(out2.astype(jnp.float32), ref2, atol=5e-2, rtol=5e-2), (
        f"tiled-batch mismatch vs reference (max abs err {err2})")

    print("KERNEL_OK")
</pallas_src>

<mosaic_0001>
module attributes {stable_mosaic.version = 11 : i64} {
  func.func @mlp_kernel(%arg0: i32, %arg1: memref<8x12xf32, #tpu.memory_space<vmem>>, %arg2: memref<12x512xbf16, #tpu.memory_space<vmem>>, %arg3: memref<1x512xf32, #tpu.memory_space<vmem>>, %arg4: memref<512x128xbf16, #tpu.memory_space<vmem>>, %arg5: memref<1x128xf32, #tpu.memory_space<vmem>>, %arg6: memref<128x128xbf16, #tpu.memory_space<vmem>>, %arg7: memref<1x128xf32, #tpu.memory_space<vmem>>, %arg8: memref<128x128xbf16, #tpu.memory_space<vmem>>, %arg9: memref<1x128xf32, #tpu.memory_space<vmem>>, %arg10: memref<8x128xbf16, #tpu.memory_space<vmem>>) attributes {dimension_semantics = [#tpu.dimension_semantics<parallel>], iteration_bounds = array<i64: 1>, scalar_prefetch = 0 : i64, scratch_operands = 0 : i64, tpu.core_type = #tpu.core_type<tc>, window_params = [{transform_indices = @transform_0, window_bounds = array<i64: 8, 12>}, {pipeline_mode = #tpu.pipeline_mode<synchronous>, transform_indices = @transform_1, window_bounds = array<i64: 12, 512>}, {pipeline_mode = #tpu.pipeline_mode<synchronous>, transform_indices = @transform_2, window_bounds = array<i64: 1, 512>}, {pipeline_mode = #tpu.pipeline_mode<synchronous>, transform_indices = @transform_3, window_bounds = array<i64: 512, 128>}, {pipeline_mode = #tpu.pipeline_mode<synchronous>, transform_indices = @transform_4, window_bounds = array<i64: 1, 128>}, {pipeline_mode = #tpu.pipeline_mode<synchronous>, transform_indices = @transform_5, window_bounds = array<i64: 128, 128>}, {pipeline_mode = #tpu.pipeline_mode<synchronous>, transform_indices = @transform_6, window_bounds = array<i64: 1, 128>}, {pipeline_mode = #tpu.pipeline_mode<synchronous>, transform_indices = @transform_7, window_bounds = array<i64: 128, 128>}, {pipeline_mode = #tpu.pipeline_mode<synchronous>, transform_indices = @transform_8, window_bounds = array<i64: 1, 128>}, {transform_indices = @transform_9, window_bounds = array<i64: 8, 128>}]} {
    %c0 = arith.constant 0 : index
    %c0_0 = arith.constant 0 : index
    %0 = vector.load %arg1[%c0, %c0_0] : memref<8x12xf32, #tpu.memory_space<vmem>>, vector<8x12xf32>
    %1 = arith.truncf %0 : vector<8x12xf32> to vector<8x12xbf16>
    %c0_1 = arith.constant 0 : index
    %c0_2 = arith.constant 0 : index
    %2 = vector.load %arg2[%c0_1, %c0_2] : memref<12x512xbf16, #tpu.memory_space<vmem>>, vector<12x512xbf16>
    %cst = arith.constant dense<0.000000e+00> : vector<8x512xf32>
    %3 = tpu.matmul %1, %2, %cst {dimension_numbers = #tpu.dot_dimension_numbers<[1], [0], [0], [1], [0, 0, 1, 1], [], []>} : vector<8x12xbf16>, vector<12x512xbf16>, vector<8x512xf32> -> vector<8x512xf32>
    %c0_3 = arith.constant 0 : index
    %c0_4 = arith.constant 0 : index
    %4 = vector.load %arg3[%c0_3, %c0_4] : memref<1x512xf32, #tpu.memory_space<vmem>>, vector<1x512xf32>
    %5 = vector.broadcast %4 : vector<1x512xf32> to vector<8x512xf32>
    %6 = arith.addf %3, %5 : vector<8x512xf32>
    %cst_5 = arith.constant 0.000000e+00 : f32
    %7 = vector.broadcast %cst_5 : f32 to vector<8x512xf32>
    %8 = arith.maximumf %6, %7 : vector<8x512xf32>
    %9 = arith.truncf %8 : vector<8x512xf32> to vector<8x512xbf16>
    %c0_6 = arith.constant 0 : index
    %c0_7 = arith.constant 0 : index
    %10 = vector.load %arg4[%c0_6, %c0_7] : memref<512x128xbf16, #tpu.memory_space<vmem>>, vector<512x128xbf16>
    %cst_8 = arith.constant dense<0.000000e+00> : vector<8x128xf32>
    %11 = tpu.matmul %9, %10, %cst_8 {dimension_numbers = #tpu.dot_dimension_numbers<[1], [0], [0], [1], [0, 0, 1, 1], [], []>} : vector<8x512xbf16>, vector<512x128xbf16>, vector<8x128xf32> -> vector<8x128xf32>
    %c0_9 = arith.constant 0 : index
    %c0_10 = arith.constant 0 : index
    %12 = vector.load %arg5[%c0_9, %c0_10] : memref<1x128xf32, #tpu.memory_space<vmem>>, vector<1x128xf32>
    %13 = vector.broadcast %12 : vector<1x128xf32> to vector<8x128xf32>
    %14 = arith.addf %11, %13 : vector<8x128xf32>
    %cst_11 = arith.constant 0.000000e+00 : f32
    %15 = vector.broadcast %cst_11 : f32 to vector<8x128xf32>
    %16 = arith.maximumf %14, %15 : vector<8x128xf32>
    %17 = arith.truncf %16 : vector<8x128xf32> to vector<8x128xbf16>
    %c0_12 = arith.constant 0 : index
    %c0_13 = arith.constant 0 : index
    %18 = vector.load %arg6[%c0_12, %c0_13] : memref<128x128xbf16, #tpu.memory_space<vmem>>, vector<128x128xbf16>
    %cst_14 = arith.constant dense<0.000000e+00> : vector<8x128xf32>
    %19 = tpu.matmul %17, %18, %cst_14 {dimension_numbers = #tpu.dot_dimension_numbers<[1], [0], [0], [1], [0, 0, 1, 1], [], []>} : vector<8x128xbf16>, vector<128x128xbf16>, vector<8x128xf32> -> vector<8x128xf32>
    %c0_15 = arith.constant 0 : index
    %c0_16 = arith.constant 0 : index
    %20 = vector.load %arg7[%c0_15, %c0_16] : memref<1x128xf32, #tpu.memory_space<vmem>>, vector<1x128xf32>
    %21 = vector.broadcast %20 : vector<1x128xf32> to vector<8x128xf32>
    %22 = arith.addf %19, %21 : vector<8x128xf32>
    %cst_17 = arith.constant 0.000000e+00 : f32
    %23 = vector.broadcast %cst_17 : f32 to vector<8x128xf32>
    %24 = arith.maximumf %22, %23 : vector<8x128xf32>
    %25 = arith.truncf %24 : vector<8x128xf32> to vector<8x128xbf16>
    %c0_18 = arith.constant 0 : index
    %c0_19 = arith.constant 0 : index
    %26 = vector.load %arg8[%c0_18, %c0_19] : memref<128x128xbf16, #tpu.memory_space<vmem>>, vector<128x128xbf16>
    %cst_20 = arith.constant dense<0.000000e+00> : vector<8x128xf32>
    %27 = tpu.matmul %25, %26, %cst_20 {dimension_numbers = #tpu.dot_dimension_numbers<[1], [0], [0], [1], [0, 0, 1, 1], [], []>} : vector<8x128xbf16>, vector<128x128xbf16>, vector<8x128xf32> -> vector<8x128xf32>
    %c0_21 = arith.constant 0 : index
    %c0_22 = arith.constant 0 : index
    %28 = vector.load %arg9[%c0_21, %c0_22] : memref<1x128xf32, #tpu.memory_space<vmem>>, vector<1x128xf32>
    %29 = vector.broadcast %28 : vector<1x128xf32> to vector<8x128xf32>
    %30 = arith.addf %27, %29 : vector<8x128xf32>
    %31 = arith.truncf %30 : vector<8x128xf32> to vector<8x128xbf16>
    %c0_23 = arith.constant 0 : index
    %c0_24 = arith.constant 0 : index
    %32 = vector.load %arg10[%c0_23, %c0_24] : memref<8x128xbf16, #tpu.memory_space<vmem>>, vector<8x128xbf16>
    tpu.vector_store %arg10[%c0_23, %c0_24], %31 {strides = array<i32>} : memref<8x128xbf16, #tpu.memory_space<vmem>>, vector<8x128xbf16>,
    return
  }
  func.func @transform_0(%arg0: i32) -> (i32, i32) {
    %c0_i32 = arith.constant 0 : i32
    %c0_i32_0 = arith.constant 0 : i32
    return %arg0, %c0_i32 : i32, i32
  }
  func.func @transform_1(%arg0: i32) -> (i32, i32) {
    %c0_i32 = arith.constant 0 : i32
    %c0_i32_0 = arith.constant 0 : i32
    %c0_i32_1 = arith.constant 0 : i32
    return %c0_i32, %c0_i32_0 : i32, i32
  }
  func.func @transform_2(%arg0: i32) -> (i32, i32) {
    %c0_i32 = arith.constant 0 : i32
    %c0_i32_0 = arith.constant 0 : i32
    %c0_i32_1 = arith.constant 0 : i32
    return %c0_i32, %c0_i32_0 : i32, i32
  }
  func.func @transform_3(%arg0: i32) -> (i32, i32) {
    %c0_i32 = arith.constant 0 : i32
    %c0_i32_0 = arith.constant 0 : i32
    %c0_i32_1 = arith.constant 0 : i32
    return %c0_i32, %c0_i32_0 : i32, i32
  }
  func.func @transform_4(%arg0: i32) -> (i32, i32) {
    %c0_i32 = arith.constant 0 : i32
    %c0_i32_0 = arith.constant 0 : i32
    %c0_i32_1 = arith.constant 0 : i32
    return %c0_i32, %c0_i32_0 : i32, i32
  }
  func.func @transform_5(%arg0: i32) -> (i32, i32) {
    %c0_i32 = arith.constant 0 : i32
    %c0_i32_0 = arith.constant 0 : i32
    %c0_i32_1 = arith.constant 0 : i32
    return %c0_i32, %c0_i32_0 : i32, i32
  }
  func.func @transform_6(%arg0: i32) -> (i32, i32) {
    %c0_i32 = arith.constant 0 : i32
    %c0_i32_0 = arith.constant 0 : i32
    %c0_i32_1 = arith.constant 0 : i32
    return %c0_i32, %c0_i32_0 : i32, i32
  }
  func.func @transform_7(%arg0: i32) -> (i32, i32) {
    %c0_i32 = arith.constant 0 : i32
    %c0_i32_0 = arith.constant 0 : i32
    %c0_i32_1 = arith.constant 0 : i32
    return %c0_i32, %c0_i32_0 : i32, i32
  }
  func.func @transform_8(%arg0: i32) -> (i32, i32) {
    %c0_i32 = arith.constant 0 : i32
    %c0_i32_0 = arith.constant 0 : i32
    %c0_i32_1 = arith.constant 0 : i32
    return %c0_i32, %c0_i32_0 : i32, i32
  }
  func.func @transform_9(%arg0: i32) -> (i32, i32) {
    %c0_i32 = arith.constant 0 : i32
    %c0_i32_0 = arith.constant 0 : i32
    return %arg0, %c0_i32 : i32, i32
  }
}

module attributes {stable_mosaic.version = 11 : i64} {
  func.func @mlp_kernel(%arg0: i32, %arg1: memref<8x12xf32, #tpu.memory_space<vmem>>, %arg2: memref<12x512xbf16, #tpu.memory_space<vmem>>, %arg3: memref<1x512xf32, #tpu.memory_space<vmem>>, %arg4: memref<512x128xbf16, #tpu.memory_space<vmem>>, %arg5: memref<1x128xf32, #tpu.memory_space<vmem>>, %arg6: memref<128x128xbf16, #tpu.memory_space<vmem>>, %arg7: memref<1x128xf32, #tpu.memory_space<vmem>>, %arg8: memref<128x128xbf16, #tpu.memory_space<vmem>>, %arg9: memref<1x128xf32, #tpu.memory_space<vmem>>, %arg10: memref<8x128xbf16, #tpu.memory_space<vmem>>) attributes {dimension_semantics = [#tpu.dimension_semantics<parallel>], iteration_bounds = array<i64: 1>, scalar_prefetch = 0 : i64, scratch_operands = 0 : i64, tpu.core_type = #tpu.core_type<tc>, window_params = [{transform_indices = @transform_0, window_bounds = array<i64: 8, 12>}, {pipeline_mode = #tpu.pipeline_mode<synchronous>, transform_indices = @transform_1, window_bounds = array<i64: 12, 512>}, {pipeline_mode = #tpu.pipeline_mode<synchronous>, transform_indices = @transform_2, window_bounds = array<i64: 1, 512>}, {pipeline_mode = #tpu.pipeline_mode<synchronous>, transform_indices = @transform_3, window_bounds = array<i64: 512, 128>}, {pipeline_mode = #tpu.pipeline_mode<synchronous>, transform_indices = @transform_4, window_bounds = array<i64: 1, 128>}, {pipeline_mode = #tpu.pipeline_mode<synchronous>, transform_indices = @transform_5, window_bounds = array<i64: 128, 128>}, {pipeline_mode = #tpu.pipeline_mode<synchronous>, transform_indices = @transform_6, window_bounds = array<i64: 1, 128>}, {pipeline_mode = #tpu.pipeline_mode<synchronous>, transform_indices = @transform_7, window_bounds = array<i64: 128, 128>}, {pipeline_mode = #tpu.pipeline_mode<synchronous>, transform_indices = @transform_8, window_bounds = array<i64: 1, 128>}, {transform_indices = @transform_9, window_bounds = array<i64: 8, 128>}]} {
    %c0 = arith.constant 0 : index
    %c0_0 = arith.constant 0 : index
    %0 = vector.load %arg1[%c0, %c0_0] : memref<8x12xf32, #tpu.memory_space<vmem>>, vector<8x12xf32>
    %1 = arith.truncf %0 : vector<8x12xf32> to vector<8x12xbf16>
    %c0_1 = arith.constant 0 : index
    %c0_2 = arith.constant 0 : index
    %2 = vector.load %arg2[%c0_1, %c0_2] : memref<12x512xbf16, #tpu.memory_space<vmem>>, vector<12x512xbf16>
    %cst = arith.constant dense<0.000000e+00> : vector<8x512xf32>
    %3 = tpu.matmul %1, %2, %cst {dimension_numbers = #tpu.dot_dimension_numbers<[1], [0], [0], [1], [0, 0, 1, 1], [], []>} : vector<8x12xbf16>, vector<12x512xbf16>, vector<8x512xf32> -> vector<8x512xf32>
    %c0_3 = arith.constant 0 : index
    %c0_4 = arith.constant 0 : index
    %4 = vector.load %arg3[%c0_3, %c0_4] : memref<1x512xf32, #tpu.memory_space<vmem>>, vector<1x512xf32>
    %5 = vector.broadcast %4 : vector<1x512xf32> to vector<8x512xf32>
    %6 = arith.addf %3, %5 : vector<8x512xf32>
    %cst_5 = arith.constant 0.000000e+00 : f32
    %7 = vector.broadcast %cst_5 : f32 to vector<8x512xf32>
    %8 = arith.maximumf %6, %7 : vector<8x512xf32>
    %9 = arith.truncf %8 : vector<8x512xf32> to vector<8x512xbf16>
    %c0_6 = arith.constant 0 : index
    %c0_7 = arith.constant 0 : index
    %10 = vector.load %arg4[%c0_6, %c0_7] : memref<512x128xbf16, #tpu.memory_space<vmem>>, vector<512x128xbf16>
    %cst_8 = arith.constant dense<0.000000e+00> : vector<8x128xf32>
    %11 = tpu.matmul %9, %10, %cst_8 {dimension_numbers = #tpu.dot_dimension_numbers<[1], [0], [0], [1], [0, 0, 1, 1], [], []>} : vector<8x512xbf16>, vector<512x128xbf16>, vector<8x128xf32> -> vector<8x128xf32>
    %c0_9 = arith.constant 0 : index
    %c0_10 = arith.constant 0 : index
    %12 = vector.load %arg5[%c0_9, %c0_10] : memref<1x128xf32, #tpu.memory_space<vmem>>, vector<1x128xf32>
    %13 = vector.broadcast %12 : vector<1x128xf32> to vector<8x128xf32>
    %14 = arith.addf %11, %13 : vector<8x128xf32>
    %cst_11 = arith.constant 0.000000e+00 : f32
    %15 = vector.broadcast %cst_11 : f32 to vector<8x128xf32>
    %16 = arith.maximumf %14, %15 : vector<8x128xf32>
    %17 = arith.truncf %16 : vector<8x128xf32> to vector<8x128xbf16>
    %c0_12 = arith.constant 0 : index
    %c0_13 = arith.constant 0 : index
    %18 = vector.load %arg6[%c0_12, %c0_13] : memref<128x128xbf16, #tpu.memory_space<vmem>>, vector<128x128xbf16>
    %cst_14 = arith.constant dense<0.000000e+00> : vector<8x128xf32>
    %19 = tpu.matmul %17, %18, %cst_14 {dimension_numbers = #tpu.dot_dimension_numbers<[1], [0], [0], [1], [0, 0, 1, 1], [], []>} : vector<8x128xbf16>, vector<128x128xbf16>, vector<8x128xf32> -> vector<8x128xf32>
    %c0_15 = arith.constant 0 : index
    %c0_16 = arith.constant 0 : index
    %20 = vector.load %arg7[%c0_15, %c0_16] : memref<1x128xf32, #tpu.memory_space<vmem>>, vector<1x128xf32>
    %21 = vector.broadcast %20 : vector<1x128xf32> to vector<8x128xf32>
    %22 = arith.addf %19, %21 : vector<8x128xf32>
    %cst_17 = arith.constant 0.000000e+00 : f32
    %23 = vector.broadcast %cst_17 : f32 to vector<8x128xf32>
    %24 = arith.maximumf %22, %23 : vector<8x128xf32>
    %25 = arith.truncf %24 : vector<8x128xf32> to vector<8x128xbf16>
    %c0_18 = arith.constant 0 : index
    %c0_19 = arith.constant 0 : index
    %26 = vector.load %arg8[%c0_18, %c0_19] : memref<128x128xbf16, #tpu.memory_space<vmem>>, vector<128x128xbf16>
    %cst_20 = arith.constant dense<0.000000e+00> : vector<8x128xf32>
    %27 = tpu.matmul %25, %26, %cst_20 {dimension_numbers = #tpu.dot_dimension_numbers<[1], [0], [0], [1], [0, 0, 1, 1], [], []>} : vector<8x128xbf16>, vector<128x128xbf16>, vector<8x128xf32> -> vector<8x128xf32>
    %c0_21 = arith.constant 0 : index
    %c0_22 = arith.constant 0 : index
    %28 = vector.load %arg9[%c0_21, %c0_22] : memref<1x128xf32, #tpu.memory_space<vmem>>, vector<1x128xf32>
    %29 = vector.broadcast %28 : vector<1x128xf32> to vector<8x128xf32>
    %30 = arith.addf %27, %29 : vector<8x128xf32>
    %31 = arith.truncf %30 : vector<8x128xf32> to vector<8x128xbf16>
    %c0_23 = arith.constant 0 : index
    %c0_24 = arith.constant 0 : index
    %32 = vector.load %arg10[%c0_23, %c0_24] : memref<8x128xbf16, #tpu.memory_space<vmem>>, vector<8x128xbf16>
    tpu.vector_store %arg10[%c0_23, %c0_24], %31 {strides = array<i32>} : memref<8x128xbf16, #tpu.memory_space<vmem>>, vector<8x128xbf16>,
    return
  }
  func.func @transform_0(%arg0: i32) -> (i32, i32) {
    %c0_i32 = arith.constant 0 : i32
    %c0_i32_0 = arith.constant 0 : i32
    return %arg0, %c0_i32 : i32, i32
  }
  func.func @transform_1(%arg0: i32) -> (i32, i32) {
    %c0_i32 = arith.constant 0 : i32
    %c0_i32_0 = arith.constant 0 : i32
    %c0_i32_1 = arith.constant 0 : i32
    return %c0_i32, %c0_i32_0 : i32, i32
  }
  func.func @transform_2(%arg0: i32) -> (i32, i32) {
    %c0_i32 = arith.constant 0 : i32
    %c0_i32_0 = arith.constant 0 : i32
    %c0_i32_1 = arith.constant 0 : i32
    return %c0_i32, %c0_i32_0 : i32, i32
  }
  func.func @transform_3(%arg0: i32) -> (i32, i32) {
    %c0_i32 = arith.constant 0 : i32
    %c0_i32_0 = arith.constant 0 : i32
    %c0_i32_1 = arith.constant 0 : i32
    return %c0_i32, %c0_i32_0 : i32, i32
  }
  func.func @transform_4(%arg0: i32) -> (i32, i32) {
    %c0_i32 = arith.constant 0 : i32
    %c0_i32_0 = arith.constant 0 : i32
    %c0_i32_1 = arith.constant 0 : i32
    return %c0_i32, %c0_i32_0 : i32, i32
  }
  func.func @transform_5(%arg0: i32) -> (i32, i32) {
    %c0_i32 = arith.constant 0 : i32
    %c0_i32_0 = arith.constant 0 : i32
    %c0_i32_1 = arith.constant 0 : i32
    return %c0_i32, %c0_i32_0 : i32, i32
  }
  func.func @transform_6(%arg0: i32) -> (i32, i32) {
    %c0_i32 = arith.constant 0 : i32
    %c0_i32_0 = arith.constant 0 : i32
    %c0_i32_1 = arith.constant 0 : i32
    return %c0_i32, %c0_i32_0 : i32, i32
  }
  func.func @transform_7(%arg0: i32) -> (i32, i32) {
    %c0_i32 = arith.constant 0 : i32
    %c0_i32_0 = arith.constant 0 : i32
    %c0_i32_1 = arith.constant 0 : i32
    return %c0_i32, %c0_i32_0 : i32, i32
  }
  func.func @transform_8(%arg0: i32) -> (i32, i32) {
    %c0_i32 = arith.constant 0 : i32
    %c0_i32_0 = arith.constant 0 : i32
    %c0_i32_1 = arith.constant 0 : i32
    return %c0_i32, %c0_i32_0 : i32, i32
  }
  func.func @transform_9(%arg0: i32) -> (i32, i32) {
    %c0_i32 = arith.constant 0 : i32
    %c0_i32_0 = arith.constant 0 : i32
    return %arg0, %c0_i32 : i32, i32
  }
}

</mosaic_0001>

<llo_original>
// kernel: tpu_custom_call.1
$region0: #{tpu_custom_call.1}
  #allocation0 [shape = 'u32[]', space=smem, size = 0x4, offset = 0x4, fixed_abs, tag = 'smem constant byte address 0x4 - core index']
  #allocation1 [shape = 'u32[144,128]{1,0:T(1,128)}', space=vmem, size = 0x12000, scoped, tag = 'internal scratch']
  %s0 = inlined_call_operand.hbm [shape: f32[8,12], index: 0, kind: input, shape index: {}]
  %s1 = inlined_call_operand.hbm [shape: bf16[12,512], index: 1, kind: input, shape index: {}]
  %s2 = inlined_call_operand.hbm [shape: f32[1,512], index: 2, kind: input, shape index: {}]
  %s3 = inlined_call_operand.hbm [shape: bf16[512,128], index: 3, kind: input, shape index: {}]
  %s4 = inlined_call_operand.vmem [shape: f32[1,128], index: 4, kind: input, shape index: {}]
  %s5 = inlined_call_operand.hbm [shape: bf16[128,128], index: 5, kind: input, shape index: {}]
  %s6 = inlined_call_operand.vmem [shape: f32[1,128], index: 6, kind: input, shape index: {}]
  %s7 = inlined_call_operand.hbm [shape: bf16[128,128], index: 7, kind: input, shape index: {}]
  %s8 = inlined_call_operand.vmem [shape: f32[1,128], index: 8, kind: input, shape index: {}]
  %s9 = inlined_call_operand.hbm [shape: bf16[8,128], index: 9, kind: output, shape index: {}]
  %s10 = sld [smem:[#allocation0]]
  $region70: #{tpu_custom_call.1} parent=0
    _
  %s12 = ssub.s32 1, %s10
  %s13 = scalar_select 0, %s12, %s10
  $region1: #{tpu_custom_call.1} parent=0
    #allocation2 [shape = 'u8[4096]{0}', space=vmem, size = 0x1000, scoped, tag = 'input window, operand 0, single buffered']
    #allocation3 [shape = 's32[1]{0}', space=sflag, size = 0x4, scoped, tag = 'scoped memory for tpu_custom_call.1']
    #allocation4 [shape = 's32[1]{0}', space=sflag, size = 0x4, scoped, tag = 'scoped memory for tpu_custom_call.1']
    #allocation5 [shape = 'u8[16384]{0}', space=vmem, size = 0x4000, scoped, tag = 'input window, operand 1, single buffered']
    #allocation6 [shape = 's32[1]{0}', space=sflag, size = 0x4, scoped, tag = 'scoped memory for tpu_custom_call.1']
    #allocation7 [shape = 'u8[2048]{0}', space=vmem, size = 0x800, scoped, tag = 'input window, operand 2, single buffered']
    #allocation8 [shape = 'u8[131072]{0}', space=vmem, size = 0x20000, scoped, tag = 'input window, operand 3, single buffered']
    #allocation9 [shape = 's32[1]{0}', space=sflag, size = 0x4, scoped, tag = 'scoped memory for tpu_custom_call.1']
    #allocation10 [shape = 'u8[32768]{0}', space=vmem, size = 0x8000, scoped, tag = 'input window, operand 5, single buffered']
    #allocation11 [shape = 'u8[32768]{0}', space=vmem, size = 0x8000, scoped, tag = 'input window, operand 7, single buffered']
    #allocation12 [shape = 's32[1]{0}', space=sflag, size = 0x4, scoped, tag = 'scoped memory for tpu_custom_call.1']
    #allocation13 [shape = 'u8[2048]{0}', space=vmem, size = 0x800, scoped, tag = 'output window, operand 0, single buffered']
    %14 = vsyncpa [#allocation3], 0
    %15 = vsyncpa [#allocation6], 0
    %16 = vsyncpa [#allocation9], 0
    %17 = vsyncpa [#allocation12], 0
    %18 = vsyncpa [#allocation4], 0
    // Predicated region
    $region2: #{tpu_custom_call.1} parent=1 // pred_check
      _
    $region3: #{tpu_custom_call.1} parent=1 // pred_check_branch
      %20 = sbr.rel (0) target = $region5
    $region4: #{tpu_custom_call.1} parent=1 // pred_region
      %s22 = ssub.s32 128, 128
      %23 = vsyncadd [#allocation3], %s22
      %s25 = sshll.u32 [#allocation2], 4
      %s26 = int_to_ptr.vmem [resolvable:$true] %s25
      %28 = dma.hbm_to_vmem [thread:$0]  %s0, 128, %s26, [#allocation3]
    $region5: #{tpu_custom_call.1} parent=1 // pred_fallthru
      _
    // Predicated region
    $region6: #{tpu_custom_call.1} parent=1 // pred_check
      _
    $region7: #{tpu_custom_call.1} parent=1 // pred_check_branch
      %30 = sbr.rel (0) target = $region9
    $region8: #{tpu_custom_call.1} parent=1 // pred_region
      %s32 = ssub.s32 512, 512
      %33 = vsyncadd [#allocation6], %s32
      %s34 = sshll.u32 [#allocation5], 4
      %s35 = int_to_ptr.vmem [resolvable:$true] %s34
      %40 = dma.hbm_to_vmem [thread:$0]  %s1, 512, %s35, [#allocation6], 256, 256, 16
    $region9: #{tpu_custom_call.1} parent=1 // pred_fallthru
      _
    // Predicated region
    $region10: #{tpu_custom_call.1} parent=1 // pred_check
      _
    $region11: #{tpu_custom_call.1} parent=1 // pred_check_branch
      %42 = sbr.rel (0) target = $region13
    $region12: #{tpu_custom_call.1} parent=1 // pred_region
      %s44 = ssub.s32 64, 64
      %45 = vsyncadd [#allocation6], %s44
      %s47 = sshll.u32 [#allocation7], 4
      %s48 = int_to_ptr.vmem [resolvable:$true] %s47
      %50 = dma.hbm_to_vmem [thread:$0]  %s2, 64, %s48, [#allocation6]
    $region13: #{tpu_custom_call.1} parent=1 // pred_fallthru
      _
    // Predicated region
    $region14: #{tpu_custom_call.1} parent=1 // pred_check
      _
    $region15: #{tpu_custom_call.1} parent=1 // pred_check_branch
      %52 = sbr.rel (0) target = $region17
    $region16: #{tpu_custom_call.1} parent=1 // pred_region
      %s54 = ssub.s32 4096, 4096
      %55 = vsyncadd [#allocation9], %s54
      %s56 = sshll.u32 [#allocation8], 4
      %s57 = int_to_ptr.vmem [resolvable:$true] %s56
      %62 = dma.hbm_to_vmem [thread:$0]  %s3, 4096, %s57, [#allocation9], 64, 64, 4
    $region17: #{tpu_custom_call.1} parent=1 // pred_fallthru
      _
    // Predicated region
    $region18: #{tpu_custom_call.1} parent=1 // pred_check
      _
    $region19: #{tpu_custom_call.1} parent=1 // pred_check_branch
      %64 = sbr.rel (0) target = $region21
    $region20: #{tpu_custom_call.1} parent=1 // pred_region
      _
    $region21: #{tpu_custom_call.1} parent=1 // pred_fallthru
      _
    // Predicated region
    $region22: #{tpu_custom_call.1} parent=1 // pred_check
      _
    $region23: #{tpu_custom_call.1} parent=1 // pred_check_branch
      %66 = sbr.rel (0) target = $region25
    $region24: #{tpu_custom_call.1} parent=1 // pred_region
      %s68 = ssub.s32 1024, 1024
      %69 = vsyncadd [#allocation9], %s68
      %s70 = sshll.u32 [#allocation10], 4
      %s71 = int_to_ptr.vmem [resolvable:$true] %s70
      %76 = dma.hbm_to_vmem [thread:$0]  %s5, 1024, %s71, [#allocation9], 64, 64, 4
    $region25: #{tpu_custom_call.1} parent=1 // pred_fallthru
      _
    // Predicated region
    $region26: #{tpu_custom_call.1} parent=1 // pred_check
      _
    $region27: #{tpu_custom_call.1} parent=1 // pred_check_branch
      %78 = sbr.rel (0) target = $region29
    $region28: #{tpu_custom_call.1} parent=1 // pred_region
      _
    $region29: #{tpu_custom_call.1} parent=1 // pred_fallthru
      _
    // Predicated region
    $region30: #{tpu_custom_call.1} parent=1 // pred_check
      _
    $region31: #{tpu_custom_call.1} parent=1 // pred_check_branch
      %80 = sbr.rel (0) target = $region33
    $region32: #{tpu_custom_call.1} parent=1 // pred_region
      %s82 = ssub.s32 1024, 1024
      %83 = vsyncadd [#allocation12], %s82
      %s84 = sshll.u32 [#allocation11], 4
      %s85 = int_to_ptr.vmem [resolvable:$true] %s84
      %90 = dma.hbm_to_vmem [thread:$0]  %s7, 1024, %s85, [#allocation12], 64, 64, 4
    $region33: #{tpu_custom_call.1} parent=1 // pred_fallthru
      _
    // Predicated region
    $region34: #{tpu_custom_call.1} parent=1 // pred_check
      _
    $region35: #{tpu_custom_call.1} parent=1 // pred_check_branch
      %92 = sbr.rel (0) target = $region37
    $region36: #{tpu_custom_call.1} parent=1 // pred_region
      _
    $region37: #{tpu_custom_call.1} parent=1 // pred_fallthru
      _
    // Predicated region
    $region38: #{tpu_custom_call.1} parent=1 // pred_check
      _
    $region39: #{tpu_custom_call.1} parent=1 // pred_check_branch
      %94 = sbr.rel (0) target = $region41
    $region40: #{tpu_custom_call.1} parent=1 // pred_region
      %95 = dma.done [#allocation3], 128
    $region41: #{tpu_custom_call.1} parent=1 // pred_fallthru
      _
    // Predicated region
    $region42: #{tpu_custom_call.1} parent=1 // pred_check
      _
    $region43: #{tpu_custom_call.1} parent=1 // pred_check_branch
      %97 = sbr.rel (0) target = $region45
    $region44: #{tpu_custom_call.1} parent=1 // pred_region
      %98 = dma.done [#allocation6], 512
    $region45: #{tpu_custom_call.1} parent=1 // pred_fallthru
      _
    // Predicated region
    $region46: #{tpu_custom_call.1} parent=1 // pred_check
      _
    $region47: #{tpu_custom_call.1} parent=1 // pred_check_branch
      %100 = sbr.rel (0) target = $region49
    $region48: #{tpu_custom_call.1} parent=1 // pred_region
      %101 = dma.done [#allocation6], 64
    $region49: #{tpu_custom_call.1} parent=1 // pred_fallthru
      _
    // Predicated region
    $region50: #{tpu_custom_call.1} parent=1 // pred_check
      _
    $region51: #{tpu_custom_call.1} parent=1 // pred_check_branch
      %103 = sbr.rel (0) target = $region53
    $region52: #{tpu_custom_call.1} parent=1 // pred_region
      %104 = dma.done [#allocation9], 4096
    $region53: #{tpu_custom_call.1} parent=1 // pred_fallthru
      _
    // Predicated region
    $region54: #{tpu_custom_call.1} parent=1 // pred_check
      _
    $region55: #{tpu_custom_call.1} parent=1 // pred_check_branch
      %106 = sbr.rel (0) target = $region57
    $region56: #{tpu_custom_call.1} parent=1 // pred_region
      %107 = dma.done [#allocation9], 1024
    $region57: #{tpu_custom_call.1} parent=1 // pred_fallthru
      _
    // Predicated region
    $region58: #{tpu_custom_call.1} parent=1 // pred_check
      _
    $region59: #{tpu_custom_call.1} parent=1 // pred_check_branch
      %109 = sbr.rel (0) target = $region61
    $region60: #{tpu_custom_call.1} parent=1 // pred_region
      %110 = dma.done [#allocation12], 1024
    $region61: #{tpu_custom_call.1} parent=1 // pred_fallthru
      _
    %v112 = vld [vmem:[#allocation2] sm:$0xff]
    %v113 = vpack.c.bf16 %v112, %v112
    %v114 = vld [vmem:[#allocation5] sm:$0xff]
    %v115 = vld [vmem:[#allocation5 + $0x8] sm:$0xff]
    %v116 = vld [vmem:[#allocation5 + $0x10] sm:$0x33]
    %v117 = vld [vmem:[#allocation5 + $0x18] sm:$0x33]
    %v118 = vld [vmem:[#allocation7] sm:$0xf]
    %v120 = vlaneseq
    %v121 = vshrl.u32 %v120, 7
    %v122 = vsub.s32 0, %v121
    %v123 = vrot.slane %v118, %v122
    %v124 = vlaneseq
    %v125 = vshrl.u32 %v124, 7
    %v126 = vsub.s32 1, %v125
    %v127 = vrot.slane %v118, %v126
    %v128 = vlaneseq
    %v129 = vshrl.u32 %v128, 7
    %v130 = vsub.s32 2, %v129
    %v131 = vrot.slane %v118, %v130
    %v132 = vlaneseq
    %v133 = vshrl.u32 %v132, 7
    %v134 = vsub.s32 3, %v133
    %v135 = vrot.slane %v118, %v134
    %v144 = vunpack.c.l.b16 %v114
    %v145 = vunpack.c.h.b16 %v114
    %v146 = vunpack.c.l.b16 %v115
    %v147 = vunpack.c.h.b16 %v115
    %v148 = vunpack.c.l.b16 %v116
    %v149 = vunpack.c.h.b16 %v116
    %v150 = vunpack.c.l.b16 %v117
    %v151 = vunpack.c.h.b16 %v117
    %v152 = vpack.c.b16 %v148, %v144
    %v153 = vpack.c.b16 %v149, %v145
    %v154 = vpack.c.b16 %v150, %v146
    %v155 = vpack.c.b16 %v151, %v147
    %vm156 = vcmask 97280
    %v158 = vsel %vm156, %v113, 0
    %vm160 = vcmask 1045504
    %v162 = vsel %vm160, %v152, 0
    %v165 = vsel %vm160, %v153, 0
    %v168 = vsel %vm160, %v154, 0
    %v171 = vsel %vm160, %v155, 0
    %173 = vmatprep.subr.bf16.mxu0 0
    %174 = vmatpush1.bf16.msra.mxu0 0
    %175 = vmatprep.subr.bf16.mxu0 0
    %176 = vmatpush1.bf16.msra.mxu0 0
    %177 = vmatprep.subr.bf16.mxu0 0
    %178 = vmatpush1.bf16.msra.mxu0 0
    %179 = vmatprep.subr.bf16.mxu0 0
    %180 = vmatpush1.bf16.msra.mxu0 0
    %181 = vmatprep.subr.bf16.mxu0 0
    %182 = vmatpush1.bf16.msra.mxu0 0
    %183 = vmatprep.subr.bf16.mxu0 0
    %184 = vmatpush1.bf16.msra.mxu0 0
    %185 = vmatprep.subr.bf16.mxu0 0
    %186 = vmatpush1.bf16.msra.mxu0 0
    %187 = vmatprep.subr.bf16.mxu0 %v165
    %188 = vmatpush1.bf16.msra.mxu0 %v162
    %189 = vmatprep.subr.bf16.mxu0 0
    %190 = vmatpush2.bf16.msra.mxu0 0
    %191 = vmatprep.subr.bf16.mxu0 0
    %192 = vmatpush2.bf16.msra.mxu0 0
    %193 = vmatprep.subr.bf16.mxu0 0
    %194 = vmatpush2.bf16.msra.mxu0 0
    %195 = vmatprep.subr.bf16.mxu0 0
    %196 = vmatpush2.bf16.msra.mxu0 0
    %197 = vmatprep.subr.bf16.mxu0 0
    %198 = vmatpush2.bf16.msra.mxu0 0
    %199 = vmatprep.subr.bf16.mxu0 0
    %200 = vmatpush2.bf16.msra.mxu0 0
    %201 = vmatprep.subr.bf16.mxu0 0
    %202 = vmatpush2.bf16.msra.mxu0 0
    %203 = vmatprep.subr.bf16.mxu0 0
    %204 = vmatpush2.bf16.msra.mxu0 0
    %205 = vmatprep.mubr.bf16.mxu0 0
    %206 = vmatmul.mubr.bf16.gmra.mxu0 %v158
    %v207 = vpop.f32.mrf.mxu0
    %v208 = vadd.f32 %v123, %v207
    %v209 = vpop.f32.mrf.mxu0
    %v210 = vadd.f32 %v127, %v209
    %v211 = vpop.f32.mrf.mxu0
    %v212 = vpop.f32.mrf.mxu0
    %213 = vdwg.mxu0
    %214 = vmatprep.subr.bf16.mxu0 0
    %215 = vmatpush1.bf16.msra.mxu0 0
    %216 = vmatprep.subr.bf16.mxu0 0
    %217 = vmatpush1.bf16.msra.mxu0 0
    %218 = vmatprep.subr.bf16.mxu0 0
    %219 = vmatpush1.bf16.msra.mxu0 0
    %220 = vmatprep.subr.bf16.mxu0 0
    %221 = vmatpush1.bf16.msra.mxu0 0
    %222 = vmatprep.subr.bf16.mxu0 0
    %223 = vmatpush1.bf16.msra.mxu0 0
    %224 = vmatprep.subr.bf16.mxu0 0
    %225 = vmatpush1.bf16.msra.mxu0 0
    %226 = vmatprep.subr.bf16.mxu0 0
    %227 = vmatpush1.bf16.msra.mxu0 0
    %228 = vmatprep.subr.bf16.mxu0 %v171
    %229 = vmatpush1.bf16.msra.mxu0 %v168
    %230 = vmatprep.subr.bf16.mxu0 0
    %231 = vmatpush2.bf16.msra.mxu0 0
    %232 = vmatprep.subr.bf16.mxu0 0
    %233 = vmatpush2.bf16.msra.mxu0 0
    %234 = vmatprep.subr.bf16.mxu0 0
    %235 = vmatpush2.bf16.msra.mxu0 0
    %236 = vmatprep.subr.bf16.mxu0 0
    %237 = vmatpush2.bf16.msra.mxu0 0
    %238 = vmatprep.subr.bf16.mxu0 0
    %239 = vmatpush2.bf16.msra.mxu0 0
    %240 = vmatprep.subr.bf16.mxu0 0
    %241 = vmatpush2.bf16.msra.mxu0 0
    %242 = vmatprep.subr.bf16.mxu0 0
    %243 = vmatpush2.bf16.msra.mxu0 0
    %244 = vmatprep.subr.bf16.mxu0 0
    %245 = vmatpush2.bf16.msra.mxu0 0
    %246 = vmatprep.mubr.bf16.mxu0 0
    %247 = vmatmul.mubr.bf16.gmra.mxu0 %v158
    %v248 = vpop.f32.mrf.mxu0
    %v249 = vadd.f32 %v131, %v248
    %v250 = vpop.f32.mrf.mxu0
    %v251 = vadd.f32 %v135, %v250
    %v252 = vpop.f32.mrf.mxu0
    %v253 = vpop.f32.mrf.mxu0
    %254 = vdwg.mxu0
    %v255 = vmax.f32 %v208, 0.0
    %v256 = vmax.f32 %v210, 0.0
    %v257 = vmax.f32 %v249, 0.0
    %v258 = vmax.f32 %v251, 0.0
    %v259 = vpack.c.bf16 %v255, %v255
    %v260 = vpack.c.bf16 %v256, %v256
    %v261 = vpack.c.bf16 %v257, %v257
    %v262 = vpack.c.bf16 %v258, %v258
    %v263 = vld [vmem:[#allocation8] sm:$0xf]
    %v264 = vld [vmem:[#allocation8 + $0x4] sm:$0xf]
    %v265 = vld [vmem:[#allocation8 + $0x8] sm:$0xf]
    %v266 = vld [vmem:[#allocation8 + $0xc] sm:$0xf]
    %v267 = vld [vmem:[#allocation8 + $0x10] sm:$0xf]
    %v268 = vld [vmem:[#allocation8 + $0x14] sm:$0xf]
    %v269 = vld [vmem:[#allocation8 + $0x18] sm:$0xf]
    %v270 = vld [vmem:[#allocation8 + $0x1c] sm:$0xf]
    %v271 = vld [vmem:[#allocation8 + $0x20] sm:$0xf]
    %v272 = vld [vmem:[#allocation8 + $0x24] sm:$0xf]
    %v273 = vld [vmem:[#allocation8 + $0x28] sm:$0xf]
    %v274 = vld [vmem:[#allocation8 + $0x2c] sm:$0xf]
    %v275 = vld [vmem:[#allocation8 + $0x30] sm:$0xf]
    %v276 = vld [vmem:[#allocation8 + $0x34] sm:$0xf]
    %v277 = vld [vmem:[#allocation8 + $0x38] sm:$0xf]
    %v278 = vld [vmem:[#allocation8 + $0x3c] sm:$0xf]
    %v279 = vld [vmem:[#allocation8 + $0x40] sm:$0xf]
    %v280 = vld [vmem:[#allocation8 + $0x44] sm:$0xf]
    %v281 = vld [vmem:[#allocation8 + $0x48] sm:$0xf]
    %v282 = vld [vmem:[#allocation8 + $0x4c] sm:$0xf]
    %v283 = vld [vmem:[#allocation8 + $0x50] sm:$0xf]
    %v284 = vld [vmem:[#allocation8 + $0x54] sm:$0xf]
    %v285 = vld [vmem:[#allocation8 + $0x58] sm:$0xf]
    %v286 = vld [vmem:[#allocation8 + $0x5c] sm:$0xf]
    %v287 = vld [vmem:[#allocation8 + $0x60] sm:$0xf]
    %v288 = vld [vmem:[#allocation8 + $0x64] sm:$0xf]
    %v289 = vld [vmem:[#allocation8 + $0x68] sm:$0xf]
    %v290 = vld [vmem:[#allocation8 + $0x6c] sm:$0xf]
    %v291 = vld [vmem:[#allocation8 + $0x70] sm:$0xf]
    %v292 = vld [vmem:[#allocation8 + $0x74] sm:$0xf]
    %v293 = vld [vmem:[#allocation8 + $0x78] sm:$0xf]
    %v294 = vld [vmem:[#allocation8 + $0x7c] sm:$0xf]
    %v295 = vld [vmem:[#allocation8 + $0x80] sm:$0xf]
    %v296 = vld [vmem:[#allocation8 + $0x84] sm:$0xf]
    %v297 = vld [vmem:[#allocation8 + $0x88] sm:$0xf]
    %v298 = vld [vmem:[#allocation8 + $0x8c] sm:$0xf]
    %v299 = vld [vmem:[#allocation8 + $0x90] sm:$0xf]
    %v300 = vld [vmem:[#allocation8 + $0x94] sm:$0xf]
    %v301 = vld [vmem:[#allocation8 + $0x98] sm:$0xf]
    %v302 = vld [vmem:[#allocation8 + $0x9c] sm:$0xf]
    %v303 = vld [vmem:[#allocation8 + $0xa0] sm:$0xf]
    %v304 = vld [vmem:[#allocation8 + $0xa4] sm:$0xf]
    %v305 = vld [vmem:[#allocation8 + $0xa8] sm:$0xf]
    %v306 = vld [vmem:[#allocation8 + $0xac] sm:$0xf]
    %v307 = vld [vmem:[#allocation8 + $0xb0] sm:$0xf]
    %v308 = vld [vmem:[#allocation8 + $0xb4] sm:$0xf]
    %v309 = vld [vmem:[#allocation8 + $0xb8] sm:$0xf]
    %v310 = vld [vmem:[#allocation8 + $0xbc] sm:$0xf]
    %v311 = vld [vmem:[#allocation8 + $0xc0] sm:$0xf]
    %v312 = vld [vmem:[#allocation8 + $0xc4] sm:$0xf]
    %v313 = vld [vmem:[#allocation8 + $0xc8] sm:$0xf]
    %v314 = vld [vmem:[#allocation8 + $0xcc] sm:$0xf]
    %v315 = vld [vmem:[#allocation8 + $0xd0] sm:$0xf]
    %v316 = vld [vmem:[#allocation8 + $0xd4] sm:$0xf]
    %v317 = vld [vmem:[#allocation8 + $0xd8] sm:$0xf]
    %v318 = vld [vmem:[#allocation8 + $0xdc] sm:$0xf]
    %v319 = vld [vmem:[#allocation8 + $0xe0] sm:$0xf]
    %v320 = vld [vmem:[#allocation8 + $0xe4] sm:$0xf]
    %v321 = vld [vmem:[#allocation8 + $0xe8] sm:$0xf]
    %v322 = vld [vmem:[#allocation8 + $0xec] sm:$0xf]
    %v323 = vld [vmem:[#allocation8 + $0xf0] sm:$0xf]
    %v324 = vld [vmem:[#allocation8 + $0xf4] sm:$0xf]
    %v325 = vld [vmem:[#allocation8 + $0xf8] sm:$0xf]
    %v326 = vld [vmem:[#allocation8 + $0xfc] sm:$0xf]
    %v327 = vld [vmem:[%s4] sm:$0x1]
    %v329 = vlaneseq
    %v330 = vshrl.u32 %v329, 7
    %v331 = vsub.s32 0, %v330
    %v332 = vrot.slane %v327, %v331
    %v398 = vunpack.c.l.b16 %v263
    %v399 = vunpack.c.l.b16 %v264
    %v400 = vunpack.c.l.b16 %v265
    %v401 = vunpack.c.l.b16 %v266
    %v402 = vunpack.c.l.b16 %v267
    %v403 = vunpack.c.l.b16 %v268
    %v404 = vunpack.c.l.b16 %v269
    %v405 = vunpack.c.l.b16 %v270
    %v406 = vunpack.c.l.b16 %v271
    %v407 = vunpack.c.l.b16 %v272
    %v408 = vunpack.c.l.b16 %v273
    %v409 = vunpack.c.l.b16 %v274
    %v410 = vunpack.c.l.b16 %v275
    %v411 = vunpack.c.l.b16 %v276
    %v412 = vunpack.c.l.b16 %v277
    %v413 = vunpack.c.l.b16 %v278
    %v414 = vunpack.c.l.b16 %v279
    %v415 = vunpack.c.l.b16 %v280
    %v416 = vunpack.c.l.b16 %v281
    %v417 = vunpack.c.l.b16 %v282
    %v418 = vunpack.c.l.b16 %v283
    %v419 = vunpack.c.l.b16 %v284
    %v420 = vunpack.c.l.b16 %v285
    %v421 = vunpack.c.l.b16 %v286
    %v422 = vunpack.c.l.b16 %v287
    %v423 = vunpack.c.l.b16 %v288
    %v424 = vunpack.c.l.b16 %v289
    %v425 = vunpack.c.l.b16 %v290
    %v426 = vunpack.c.l.b16 %v291
    %v427 = vunpack.c.l.b16 %v292
    %v428 = vunpack.c.l.b16 %v293
    %v429 = vunpack.c.l.b16 %v294
    %v430 = vunpack.c.l.b16 %v295
    %v431 = vunpack.c.l.b16 %v296
    %v432 = vunpack.c.l.b16 %v297
    %v433 = vunpack.c.l.b16 %v298
    %v434 = vunpack.c.l.b16 %v299
    %v435 = vunpack.c.l.b16 %v300
    %v436 = vunpack.c.l.b16 %v301
    %v437 = vunpack.c.l.b16 %v302
    %v438 = vunpack.c.l.b16 %v303
    %v439 = vunpack.c.l.b16 %v304
    %v440 = vunpack.c.l.b16 %v305
    %v441 = vunpack.c.l.b16 %v306
    %v442 = vunpack.c.l.b16 %v307
    %v443 = vunpack.c.l.b16 %v308
    %v444 = vunpack.c.l.b16 %v309
    %v445 = vunpack.c.l.b16 %v310
    %v446 = vunpack.c.l.b16 %v311
    %v447 = vunpack.c.l.b16 %v312
    %v448 = vunpack.c.l.b16 %v313
    %v449 = vunpack.c.l.b16 %v314
    %v450 = vunpack.c.l.b16 %v315
    %v451 = vunpack.c.l.b16 %v316
    %v452 = vunpack.c.l.b16 %v317
    %v453 = vunpack.c.l.b16 %v318
    %v454 = vunpack.c.l.b16 %v319
    %v455 = vunpack.c.l.b16 %v320
    %v456 = vunpack.c.l.b16 %v321
    %v457 = vunpack.c.l.b16 %v322
    %v458 = vunpack.c.l.b16 %v323
    %v459 = vunpack.c.l.b16 %v324
    %v460 = vunpack.c.l.b16 %v325
    %v461 = vunpack.c.l.b16 %v326
    %v462 = vpack.c.b16 %v399, %v398
    %v463 = vpack.c.b16 %v401, %v400
    %v464 = vpack.c.b16 %v403, %v402
    %v465 = vpack.c.b16 %v405, %v404
    %v466 = vpack.c.b16 %v407, %v406
    %v467 = vpack.c.b16 %v409, %v408
    %v468 = vpack.c.b16 %v411, %v410
    %v469 = vpack.c.b16 %v413, %v412
    %v470 = vpack.c.b16 %v415, %v414
    %v471 = vpack.c.b16 %v417, %v416
    %v472 = vpack.c.b16 %v419, %v418
    %v473 = vpack.c.b16 %v421, %v420
    %v474 = vpack.c.b16 %v423, %v422
    %v475 = vpack.c.b16 %v425, %v424
    %v476 = vpack.c.b16 %v427, %v426
    %v477 = vpack.c.b16 %v429, %v428
    %v478 = vpack.c.b16 %v431, %v430
    %v479 = vpack.c.b16 %v433, %v432
    %v480 = vpack.c.b16 %v435, %v434
    %v481 = vpack.c.b16 %v437, %v436
    %v482 = vpack.c.b16 %v439, %v438
    %v483 = vpack.c.b16 %v441, %v440
    %v484 = vpack.c.b16 %v443, %v442
    %v485 = vpack.c.b16 %v445, %v444
    %v486 = vpack.c.b16 %v447, %v446
    %v487 = vpack.c.b16 %v449, %v448
    %v488 = vpack.c.b16 %v451, %v450
    %v489 = vpack.c.b16 %v453, %v452
    %v490 = vpack.c.b16 %v455, %v454
    %v491 = vpack.c.b16 %v457, %v456
    %v492 = vpack.c.b16 %v459, %v458
    %v493 = vpack.c.b16 %v461, %v460
    %526 = vmatprep.subr.bf16.mxu0 0
    %527 = vmatpush1.bf16.msra.mxu0 %v469
    %528 = vmatprep.subr.bf16.mxu0 0
    %529 = vmatpush1.bf16.msra.mxu0 %v468
    %530 = vmatprep.subr.bf16.mxu0 0
    %531 = vmatpush1.bf16.msra.mxu0 %v467
    %532 = vmatprep.subr.bf16.mxu0 0
    %533 = vmatpush1.bf16.msra.mxu0 %v466
    %534 = vmatprep.subr.bf16.mxu0 0
    %535 = vmatpush1.bf16.msra.mxu0 %v465
    %536 = vmatprep.subr.bf16.mxu0 0
    %537 = vmatpush1.bf16.msra.mxu0 %v464
    %538 = vmatprep.subr.bf16.mxu0 0
    %539 = vmatpush1.bf16.msra.mxu0 %v463
    %540 = vmatprep.subr.bf16.mxu0 0
    %541 = vmatpush1.bf16.msra.mxu0 %v462
    %542 = vmatprep.subr.bf16.mxu0 0
    %543 = vmatpush2.bf16.msra.mxu0 %v477
    %544 = vmatprep.subr.bf16.mxu0 0
    %545 = vmatpush2.bf16.msra.mxu0 %v476
    %546 = vmatprep.subr.bf16.mxu0 0
    %547 = vmatpush2.bf16.msra.mxu0 %v475
    %548 = vmatprep.subr.bf16.mxu0 0
    %549 = vmatpush2.bf16.msra.mxu0 %v474
    %550 = vmatprep.subr.bf16.mxu0 0
    %551 = vmatpush2.bf16.msra.mxu0 %v473
    %552 = vmatprep.subr.bf16.mxu0 0
    %553 = vmatpush2.bf16.msra.mxu0 %v472
    %554 = vmatprep.subr.bf16.mxu0 0
    %555 = vmatpush2.bf16.msra.mxu0 %v471
    %556 = vmatprep.subr.bf16.mxu0 0
    %557 = vmatpush2.bf16.msra.mxu0 %v470
    %558 = vmatprep.mubr.bf16.mxu0 %v260
    %559 = vmatmul.mubr.bf16.gmra.mxu0 %v259
    %v560 = vpop.f32.mrf.mxu0
    %v561 = vadd.f32 %v332, %v560
    %v562 = vpop.f32.mrf.mxu0
    %v563 = vpop.f32.mrf.mxu0
    %v564 = vpop.f32.mrf.mxu0
    %565 = vdwg.mxu0
    %566 = vmatprep.subr.bf16.mxu0 0
    %567 = vmatpush1.bf16.msra.mxu0 %v485
    %568 = vmatprep.subr.bf16.mxu0 0
    %569 = vmatpush1.bf16.msra.mxu0 %v484
    %570 = vmatprep.subr.bf16.mxu0 0
    %571 = vmatpush1.bf16.msra.mxu0 %v483
    %572 = vmatprep.subr.bf16.mxu0 0
    %573 = vmatpush1.bf16.msra.mxu0 %v482
    %574 = vmatprep.subr.bf16.mxu0 0
    %575 = vmatpush1.bf16.msra.mxu0 %v481
    %576 = vmatprep.subr.bf16.mxu0 0
    %577 = vmatpush1.bf16.msra.mxu0 %v480
    %578 = vmatprep.subr.bf16.mxu0 0
    %579 = vmatpush1.bf16.msra.mxu0 %v479
    %580 = vmatprep.subr.bf16.mxu0 0
    %581 = vmatpush1.bf16.msra.mxu0 %v478
    %582 = vmatprep.subr.bf16.mxu0 0
    %583 = vmatpush2.bf16.msra.mxu0 %v493
    %584 = vmatprep.subr.bf16.mxu0 0
    %585 = vmatpush2.bf16.msra.mxu0 %v492
    %586 = vmatprep.subr.bf16.mxu0 0
    %587 = vmatpush2.bf16.msra.mxu0 %v491
    %588 = vmatprep.subr.bf16.mxu0 0
    %589 = vmatpush2.bf16.msra.mxu0 %v490
    %590 = vmatprep.subr.bf16.mxu0 0
    %591 = vmatpush2.bf16.msra.mxu0 %v489
    %592 = vmatprep.subr.bf16.mxu0 0
    %593 = vmatpush2.bf16.msra.mxu0 %v488
    %594 = vmatprep.subr.bf16.mxu0 0
    %595 = vmatpush2.bf16.msra.mxu0 %v487
    %596 = vmatprep.subr.bf16.mxu0 0
    %597 = vmatpush2.bf16.msra.mxu0 %v486
    %598 = vmatprep.mubr.bf16.mxu0 %v262
    %599 = vmatmul.mubr.bf16.gmra.mxu0 %v261
    %v600 = vpop.f32.mrf.mxu0
    %v601 = vadd.f32 %v561, %v600
    %v602 = vpop.f32.mrf.mxu0
    %v603 = vpop.f32.mrf.mxu0
    %v604 = vpop.f32.mrf.mxu0
    %605 = vdwg.mxu0
    %v606 = vmax.f32 %v601, 0.0
    %v607 = vpack.c.bf16 %v606, %v606
    %v608 = vld [vmem:[#allocation10] sm:$0xf]
    %v609 = vld [vmem:[#allocation10 + $0x4] sm:$0xf]
    %v610 = vld [vmem:[#allocation10 + $0x8] sm:$0xf]
    %v611 = vld [vmem:[#allocation10 + $0xc] sm:$0xf]
    %v612 = vld [vmem:[#allocation10 + $0x10] sm:$0xf]
    %v613 = vld [vmem:[#allocation10 + $0x14] sm:$0xf]
    %v614 = vld [vmem:[#allocation10 + $0x18] sm:$0xf]
    %v615 = vld [vmem:[#allocation10 + $0x1c] sm:$0xf]
    %v616 = vld [vmem:[#allocation10 + $0x20] sm:$0xf]
    %v617 = vld [vmem:[#allocation10 + $0x24] sm:$0xf]
    %v618 = vld [vmem:[#allocation10 + $0x28] sm:$0xf]
    %v619 = vld [vmem:[#allocation10 + $0x2c] sm:$0xf]
    %v620 = vld [vmem:[#allocation10 + $0x30] sm:$0xf]
    %v621 = vld [vmem:[#allocation10 + $0x34] sm:$0xf]
    %v622 = vld [vmem:[#allocation10 + $0x38] sm:$0xf]
    %v623 = vld [vmem:[#allocation10 + $0x3c] sm:$0xf]
    %v624 = vld [vmem:[%s6] sm:$0x1]
    %v626 = vlaneseq
    %v627 = vshrl.u32 %v626, 7
    %v628 = vsub.s32 0, %v627
    %v629 = vrot.slane %v624, %v628
    %v647 = vunpack.c.l.b16 %v608
    %v648 = vunpack.c.l.b16 %v609
    %v649 = vunpack.c.l.b16 %v610
    %v650 = vunpack.c.l.b16 %v611
    %v651 = vunpack.c.l.b16 %v612
    %v652 = vunpack.c.l.b16 %v613
    %v653 = vunpack.c.l.b16 %v614
    %v654 = vunpack.c.l.b16 %v615
    %v655 = vunpack.c.l.b16 %v616
    %v656 = vunpack.c.l.b16 %v617
    %v657 = vunpack.c.l.b16 %v618
    %v658 = vunpack.c.l.b16 %v619
    %v659 = vunpack.c.l.b16 %v620
    %v660 = vunpack.c.l.b16 %v621
    %v661 = vunpack.c.l.b16 %v622
    %v662 = vunpack.c.l.b16 %v623
    %v663 = vpack.c.b16 %v648, %v647
    %v664 = vpack.c.b16 %v650, %v649
    %v665 = vpack.c.b16 %v652, %v651
    %v666 = vpack.c.b16 %v654, %v653
    %v667 = vpack.c.b16 %v656, %v655
    %v668 = vpack.c.b16 %v658, %v657
    %v669 = vpack.c.b16 %v660, %v659
    %v670 = vpack.c.b16 %v662, %v661
    %679 = vmatprep.subr.bf16.mxu0 0
    %680 = vmatpush1.bf16.msra.mxu0 %v670
    %681 = vmatprep.subr.bf16.mxu0 0
    %682 = vmatpush1.bf16.msra.mxu0 %v669
    %683 = vmatprep.subr.bf16.mxu0 0
    %684 = vmatpush1.bf16.msra.mxu0 %v668
    %685 = vmatprep.subr.bf16.mxu0 0
    %686 = vmatpush1.bf16.msra.mxu0 %v667
    %687 = vmatprep.subr.bf16.mxu0 0
    %688 = vmatpush1.bf16.msra.mxu0 %v666
    %689 = vmatprep.subr.bf16.mxu0 0
    %690 = vmatpush1.bf16.msra.mxu0 %v665
    %691 = vmatprep.subr.bf16.mxu0 0
    %692 = vmatpush1.bf16.msra.mxu0 %v664
    %693 = vmatprep.subr.bf16.mxu0 0
    %694 = vmatpush1.bf16.msra.mxu0 %v663
    %695 = vmatprep.subr.bf16.mxu0 0
    %696 = vmatpush2.bf16.msra.mxu0 0
    %697 = vmatprep.subr.bf16.mxu0 0
    %698 = vmatpush2.bf16.msra.mxu0 0
    %699 = vmatprep.subr.bf16.mxu0 0
    %700 = vmatpush2.bf16.msra.mxu0 0
    %701 = vmatprep.subr.bf16.mxu0 0
    %702 = vmatpush2.bf16.msra.mxu0 0
    %703 = vmatprep.subr.bf16.mxu0 0
    %704 = vmatpush2.bf16.msra.mxu0 0
    %705 = vmatprep.subr.bf16.mxu0 0
    %706 = vmatpush2.bf16.msra.mxu0 0
    %707 = vmatprep.subr.bf16.mxu0 0
    %708 = vmatpush2.bf16.msra.mxu0 0
    %709 = vmatprep.subr.bf16.mxu0 0
    %710 = vmatpush2.bf16.msra.mxu0 0
    %711 = vmatprep.mubr.bf16.mxu0 0
    %712 = vmatmul.mubr.bf16.gmra.mxu0 %v607
    %v713 = vpop.f32.mrf.mxu0
    %v714 = vadd.f32 %v629, %v713
    %v715 = vpop.f32.mrf.mxu0
    %v716 = vpop.f32.mrf.mxu0
    %v717 = vpop.f32.mrf.mxu0
    %718 = vdwg.mxu0
    %v719 = vmax.f32 %v714, 0.0
    %v720 = vpack.c.bf16 %v719, %v719
    %v721 = vld [vmem:[#allocation11] sm:$0xf]
    %v722 = vld [vmem:[#allocation11 + $0x4] sm:$0xf]
    %v723 = vld [vmem:[#allocation11 + $0x8] sm:$0xf]
    %v724 = vld [vmem:[#allocation11 + $0xc] sm:$0xf]
    %v725 = vld [vmem:[#allocation11 + $0x10] sm:$0xf]
    %v726 = vld [vmem:[#allocation11 + $0x14] sm:$0xf]
    %v727 = vld [vmem:[#allocation11 + $0x18] sm:$0xf]
    %v728 = vld [vmem:[#allocation11 + $0x1c] sm:$0xf]
    %v729 = vld [vmem:[#allocation11 + $0x20] sm:$0xf]
    %v730 = vld [vmem:[#allocation11 + $0x24] sm:$0xf]
    %v731 = vld [vmem:[#allocation11 + $0x28] sm:$0xf]
    %v732 = vld [vmem:[#allocation11 + $0x2c] sm:$0xf]
    %v733 = vld [vmem:[#allocation11 + $0x30] sm:$0xf]
    %v734 = vld [vmem:[#allocation11 + $0x34] sm:$0xf]
    %v735 = vld [vmem:[#allocation11 + $0x38] sm:$0xf]
    %v736 = vld [vmem:[#allocation11 + $0x3c] sm:$0xf]
    %v737 = vld [vmem:[%s8] sm:$0x1]
    %v739 = vlaneseq
    %v740 = vshrl.u32 %v739, 7
    %v741 = vsub.s32 0, %v740
    %v742 = vrot.slane %v737, %v741
    %v760 = vunpack.c.l.b16 %v721
    %v761 = vunpack.c.l.b16 %v722
    %v762 = vunpack.c.l.b16 %v723
    %v763 = vunpack.c.l.b16 %v724
    %v764 = vunpack.c.l.b16 %v725
    %v765 = vunpack.c.l.b16 %v726
    %v766 = vunpack.c.l.b16 %v727
    %v767 = vunpack.c.l.b16 %v728
    %v768 = vunpack.c.l.b16 %v729
    %v769 = vunpack.c.l.b16 %v730
    %v770 = vunpack.c.l.b16 %v731
    %v771 = vunpack.c.l.b16 %v732
    %v772 = vunpack.c.l.b16 %v733
    %v773 = vunpack.c.l.b16 %v734
    %v774 = vunpack.c.l.b16 %v735
    %v775 = vunpack.c.l.b16 %v736
    %v776 = vpack.c.b16 %v761, %v760
    %v777 = vpack.c.b16 %v763, %v762
    %v778 = vpack.c.b16 %v765, %v764
    %v779 = vpack.c.b16 %v767, %v766
    %v780 = vpack.c.b16 %v769, %v768
    %v781 = vpack.c.b16 %v771, %v770
    %v782 = vpack.c.b16 %v773, %v772
    %v783 = vpack.c.b16 %v775, %v774
    %792 = vmatprep.subr.bf16.mxu0 0
    %793 = vmatpush1.bf16.msra.mxu0 %v783
    %794 = vmatprep.subr.bf16.mxu0 0
    %795 = vmatpush1.bf16.msra.mxu0 %v782
    %796 = vmatprep.subr.bf16.mxu0 0
    %797 = vmatpush1.bf16.msra.mxu0 %v781
    %798 = vmatprep.subr.bf16.mxu0 0
    %799 = vmatpush1.bf16.msra.mxu0 %v780
    %800 = vmatprep.subr.bf16.mxu0 0
    %801 = vmatpush1.bf16.msra.mxu0 %v779
    %802 = vmatprep.subr.bf16.mxu0 0
    %803 = vmatpush1.bf16.msra.mxu0 %v778
    %804 = vmatprep.subr.bf16.mxu0 0
    %805 = vmatpush1.bf16.msra.mxu0 %v777
    %806 = vmatprep.subr.bf16.mxu0 0
    %807 = vmatpush1.bf16.msra.mxu0 %v776
    %808 = vmatprep.subr.bf16.mxu0 0
    %809 = vmatpush2.bf16.msra.mxu0 0
    %810 = vmatprep.subr.bf16.mxu0 0
    %811 = vmatpush2.bf16.msra.mxu0 0
    %812 = vmatprep.subr.bf16.mxu0 0
    %813 = vmatpush2.bf16.msra.mxu0 0
    %814 = vmatprep.subr.bf16.mxu0 0
    %815 = vmatpush2.bf16.msra.mxu0 0
    %816 = vmatprep.subr.bf16.mxu0 0
    %817 = vmatpush2.bf16.msra.mxu0 0
    %818 = vmatprep.subr.bf16.mxu0 0
    %819 = vmatpush2.bf16.msra.mxu0 0
    %820 = vmatprep.subr.bf16.mxu0 0
    %821 = vmatpush2.bf16.msra.mxu0 0
    %822 = vmatprep.subr.bf16.mxu0 0
    %823 = vmatpush2.bf16.msra.mxu0 0
    %824 = vmatprep.mubr.bf16.mxu0 0
    %825 = vmatmul.mubr.bf16.gmra.mxu0 %v720
    %v826 = vpop.f32.mrf.mxu0
    %v827 = vadd.f32 %v742, %v826
    %v828 = vpop.f32.mrf.mxu0
    %v829 = vpop.f32.mrf.mxu0
    %v830 = vpop.f32.mrf.mxu0
    %831 = vdwg.mxu0
    %v832 = vpack.c.bf16 %v827, %v827
    %833 = vst [vmem:[#allocation13] sm:$0xf] %v832
    // Predicated region
    $region62: #{tpu_custom_call.1} parent=1 // pred_check
      _
    $region63: #{tpu_custom_call.1} parent=1 // pred_check_branch
      %835 = sbr.rel (0) target = $region65
    $region64: #{tpu_custom_call.1} parent=1 // pred_region
      %s837 = ssub.s32 64, 64
      %838 = vsyncadd [#allocation4], %s837
      %s840 = sshll.u32 [#allocation13], 4
      %s841 = int_to_ptr.vmem [resolvable:$true] %s840
      %843 = dma.vmem_to_hbm [thread:$0]  %s841, 64, %s9, [#allocation4]
    $region65: #{tpu_custom_call.1} parent=1 // pred_fallthru
      _
    // Predicated region
    $region66: #{tpu_custom_call.1} parent=1 // pred_check
      _
    $region67: #{tpu_custom_call.1} parent=1 // pred_check_branch
      %845 = sbr.rel (0) target = $region69
    $region68: #{tpu_custom_call.1} parent=1 // pred_region
      %846 = dma.done [#allocation4], 64
    $region69: #{tpu_custom_call.1} parent=1 // pred_fallthru
      _
    %847 = vsyncpa [#allocation3], 1
    %848 = vsyncpa [#allocation6], 1
    %849 = vsyncpa [#allocation9], 1
    %850 = vsyncpa [#allocation12], 1
    %851 = vsyncpa [#allocation4], 1

// kernel: tpu_custom_call.1
$region0: #{tpu_custom_call.1}
  #allocation0 [shape = 'u32[]', space=smem, size = 0x4, offset = 0x4, fixed_abs, tag = 'smem constant byte address 0x4 - core index']
  #allocation1 [shape = 'u32[144,128]{1,0:T(1,128)}', space=vmem, size = 0x12000, scoped, tag = 'internal scratch']
  %s0 = inlined_call_operand.hbm [shape: f32[8,12], index: 0, kind: input, shape index: {}]
  %s1 = inlined_call_operand.hbm [shape: bf16[12,512], index: 1, kind: input, shape index: {}]
  %s2 = inlined_call_operand.hbm [shape: f32[1,512], index: 2, kind: input, shape index: {}]
  %s3 = inlined_call_operand.hbm [shape: bf16[512,128], index: 3, kind: input, shape index: {}]
  %s4 = inlined_call_operand.vmem [shape: f32[1,128], index: 4, kind: input, shape index: {}]
  %s5 = inlined_call_operand.hbm [shape: bf16[128,128], index: 5, kind: input, shape index: {}]
  %s6 = inlined_call_operand.vmem [shape: f32[1,128], index: 6, kind: input, shape index: {}]
  %s7 = inlined_call_operand.hbm [shape: bf16[128,128], index: 7, kind: input, shape index: {}]
  %s8 = inlined_call_operand.vmem [shape: f32[1,128], index: 8, kind: input, shape index: {}]
  %s9 = inlined_call_operand.hbm [shape: bf16[8,128], index: 9, kind: output, shape index: {}]
  %s10 = sld [smem:[#allocation0]]
  $region70: #{tpu_custom_call.1} parent=0
    _
  %s12 = ssub.s32 1, %s10
  %s13 = scalar_select 0, %s12, %s10
  $region1: #{tpu_custom_call.1} parent=0
    #allocation2 [shape = 'u8[4096]{0}', space=vmem, size = 0x1000, scoped, tag = 'input window, operand 0, single buffered']
    #allocation3 [shape = 's32[1]{0}', space=sflag, size = 0x4, scoped, tag = 'scoped memory for tpu_custom_call.1']
    #allocation4 [shape = 's32[1]{0}', space=sflag, size = 0x4, scoped, tag = 'scoped memory for tpu_custom_call.1']
    #allocation5 [shape = 'u8[16384]{0}', space=vmem, size = 0x4000, scoped, tag = 'input window, operand 1, single buffered']
    #allocation6 [shape = 's32[1]{0}', space=sflag, size = 0x4, scoped, tag = 'scoped memory for tpu_custom_call.1']
    #allocation7 [shape = 'u8[2048]{0}', space=vmem, size = 0x800, scoped, tag = 'input window, operand 2, single buffered']
    #allocation8 [shape = 'u8[131072]{0}', space=vmem, size = 0x20000, scoped, tag = 'input window, operand 3, single buffered']
    #allocation9 [shape = 's32[1]{0}', space=sflag, size = 0x4, scoped, tag = 'scoped memory for tpu_custom_call.1']
    #allocation10 [shape = 'u8[32768]{0}', space=vmem, size = 0x8000, scoped, tag = 'input window, operand 5, single buffered']
    #allocation11 [shape = 'u8[32768]{0}', space=vmem, size = 0x8000, scoped, tag = 'input window, operand 7, single buffered']
    #allocation12 [shape = 's32[1]{0}', space=sflag, size = 0x4, scoped, tag = 'scoped memory for tpu_custom_call.1']
    #allocation13 [shape = 'u8[2048]{0}', space=vmem, size = 0x800, scoped, tag = 'output window, operand 0, single buffered']
    %14 = vsyncpa [#allocation3], 0
    %15 = vsyncpa [#allocation6], 0
    %16 = vsyncpa [#allocation9], 0
    %17 = vsyncpa [#allocation12], 0
    %18 = vsyncpa [#allocation4], 0
    // Predicated region
    $region2: #{tpu_custom_call.1} parent=1 // pred_check
      _
    $region3: #{tpu_custom_call.1} parent=1 // pred_check_branch
      %20 = sbr.rel (0) target = $region5
    $region4: #{tpu_custom_call.1} parent=1 // pred_region
      %s22 = ssub.s32 128, 128
      %23 = vsyncadd [#allocation3], %s22
      %s25 = sshll.u32 [#allocation2], 4
      %s26 = int_to_ptr.vmem [resolvable:$true] %s25
      %28 = dma.hbm_to_vmem [thread:$0]  %s0, 128, %s26, [#allocation3]
    $region5: #{tpu_custom_call.1} parent=1 // pred_fallthru
      _
    // Predicated region
    $region6: #{tpu_custom_call.1} parent=1 // pred_check
      _
    $region7: #{tpu_custom_call.1} parent=1 // pred_check_branch
      %30 = sbr.rel (0) target = $region9
    $region8: #{tpu_custom_call.1} parent=1 // pred_region
      %s32 = ssub.s32 512, 512
      %33 = vsyncadd [#allocation6], %s32
      %s34 = sshll.u32 [#allocation5], 4
      %s35 = int_to_ptr.vmem [resolvable:$true] %s34
      %40 = dma.hbm_to_vmem [thread:$0]  %s1, 512, %s35, [#allocation6], 256, 256, 16
    $region9: #{tpu_custom_call.1} parent=1 // pred_fallthru
      _
    // Predicated region
    $region10: #{tpu_custom_call.1} parent=1 // pred_check
      _
    $region11: #{tpu_custom_call.1} parent=1 // pred_check_branch
      %42 = sbr.rel (0) target = $region13
    $region12: #{tpu_custom_call.1} parent=1 // pred_region
      %s44 = ssub.s32 64, 64
      %45 = vsyncadd [#allocation6], %s44
      %s47 = sshll.u32 [#allocation7], 4
      %s48 = int_to_ptr.vmem [resolvable:$true] %s47
      %50 = dma.hbm_to_vmem [thread:$0]  %s2, 64, %s48, [#allocation6]
    $region13: #{tpu_custom_call.1} parent=1 // pred_fallthru
      _
    // Predicated region
    $region14: #{tpu_custom_call.1} parent=1 // pred_check
      _
    $region15: #{tpu_custom_call.1} parent=1 // pred_check_branch
      %52 = sbr.rel (0) target = $region17
    $region16: #{tpu_custom_call.1} parent=1 // pred_region
      %s54 = ssub.s32 4096, 4096
      %55 = vsyncadd [#allocation9], %s54
      %s56 = sshll.u32 [#allocation8], 4
      %s57 = int_to_ptr.vmem [resolvable:$true] %s56
      %62 = dma.hbm_to_vmem [thread:$0]  %s3, 4096, %s57, [#allocation9], 64, 64, 4
    $region17: #{tpu_custom_call.1} parent=1 // pred_fallthru
      _
    // Predicated region
    $region18: #{tpu_custom_call.1} parent=1 // pred_check
      _
    $region19: #{tpu_custom_call.1} parent=1 // pred_check_branch
      %64 = sbr.rel (0) target = $region21
    $region20: #{tpu_custom_call.1} parent=1 // pred_region
      _
    $region21: #{tpu_custom_call.1} parent=1 // pred_fallthru
      _
    // Predicated region
    $region22: #{tpu_custom_call.1} parent=1 // pred_check
      _
    $region23: #{tpu_custom_call.1} parent=1 // pred_check_branch
      %66 = sbr.rel (0) target = $region25
    $region24: #{tpu_custom_call.1} parent=1 // pred_region
      %s68 = ssub.s32 1024, 1024
      %69 = vsyncadd [#allocation9], %s68
      %s70 = sshll.u32 [#allocation10], 4
      %s71 = int_to_ptr.vmem [resolvable:$true] %s70
      %76 = dma.hbm_to_vmem [thread:$0]  %s5, 1024, %s71, [#allocation9], 64, 64, 4
    $region25: #{tpu_custom_call.1} parent=1 // pred_fallthru
      _
    // Predicated region
    $region26: #{tpu_custom_call.1} parent=1 // pred_check
      _
    $region27: #{tpu_custom_call.1} parent=1 // pred_check_branch
      %78 = sbr.rel (0) target = $region29
    $region28: #{tpu_custom_call.1} parent=1 // pred_region
      _
    $region29: #{tpu_custom_call.1} parent=1 // pred_fallthru
      _
    // Predicated region
    $region30: #{tpu_custom_call.1} parent=1 // pred_check
      _
    $region31: #{tpu_custom_call.1} parent=1 // pred_check_branch
      %80 = sbr.rel (0) target = $region33
    $region32: #{tpu_custom_call.1} parent=1 // pred_region
      %s82 = ssub.s32 1024, 1024
      %83 = vsyncadd [#allocation12], %s82
      %s84 = sshll.u32 [#allocation11], 4
      %s85 = int_to_ptr.vmem [resolvable:$true] %s84
      %90 = dma.hbm_to_vmem [thread:$0]  %s7, 1024, %s85, [#allocation12], 64, 64, 4
    $region33: #{tpu_custom_call.1} parent=1 // pred_fallthru
      _
    // Predicated region
    $region34: #{tpu_custom_call.1} parent=1 // pred_check
      _
    $region35: #{tpu_custom_call.1} parent=1 // pred_check_branch
      %92 = sbr.rel (0) target = $region37
    $region36: #{tpu_custom_call.1} parent=1 // pred_region
      _
    $region37: #{tpu_custom_call.1} parent=1 // pred_fallthru
      _
    // Predicated region
    $region38: #{tpu_custom_call.1} parent=1 // pred_check
      _
    $region39: #{tpu_custom_call.1} parent=1 // pred_check_branch
      %94 = sbr.rel (0) target = $region41
    $region40: #{tpu_custom_call.1} parent=1 // pred_region
      %95 = dma.done [#allocation3], 128
    $region41: #{tpu_custom_call.1} parent=1 // pred_fallthru
      _
    // Predicated region
    $region42: #{tpu_custom_call.1} parent=1 // pred_check
      _
    $region43: #{tpu_custom_call.1} parent=1 // pred_check_branch
      %97 = sbr.rel (0) target = $region45
    $region44: #{tpu_custom_call.1} parent=1 // pred_region
      %98 = dma.done [#allocation6], 512
    $region45: #{tpu_custom_call.1} parent=1 // pred_fallthru
      _
    // Predicated region
    $region46: #{tpu_custom_call.1} parent=1 // pred_check
      _
    $region47: #{tpu_custom_call.1} parent=1 // pred_check_branch
      %100 = sbr.rel (0) target = $region49
    $region48: #{tpu_custom_call.1} parent=1 // pred_region
      %101 = dma.done [#allocation6], 64
    $region49: #{tpu_custom_call.1} parent=1 // pred_fallthru
      _
    // Predicated region
    $region50: #{tpu_custom_call.1} parent=1 // pred_check
      _
    $region51: #{tpu_custom_call.1} parent=1 // pred_check_branch
      %103 = sbr.rel (0) target = $region53
    $region52: #{tpu_custom_call.1} parent=1 // pred_region
      %104 = dma.done [#allocation9], 4096
    $region53: #{tpu_custom_call.1} parent=1 // pred_fallthru
      _
    // Predicated region
    $region54: #{tpu_custom_call.1} parent=1 // pred_check
      _
    $region55: #{tpu_custom_call.1} parent=1 // pred_check_branch
      %106 = sbr.rel (0) target = $region57
    $region56: #{tpu_custom_call.1} parent=1 // pred_region
      %107 = dma.done [#allocation9], 1024
    $region57: #{tpu_custom_call.1} parent=1 // pred_fallthru
      _
    // Predicated region
    $region58: #{tpu_custom_call.1} parent=1 // pred_check
      _
    $region59: #{tpu_custom_call.1} parent=1 // pred_check_branch
      %109 = sbr.rel (0) target = $region61
    $region60: #{tpu_custom_call.1} parent=1 // pred_region
      %110 = dma.done [#allocation12], 1024
    $region61: #{tpu_custom_call.1} parent=1 // pred_fallthru
      _
    %v112 = vld [vmem:[#allocation2] sm:$0xff]
    %v113 = vpack.c.bf16 %v112, %v112
    %v114 = vld [vmem:[#allocation5] sm:$0xff]
    %v115 = vld [vmem:[#allocation5 + $0x8] sm:$0xff]
    %v116 = vld [vmem:[#allocation5 + $0x10] sm:$0x33]
    %v117 = vld [vmem:[#allocation5 + $0x18] sm:$0x33]
    %v118 = vld [vmem:[#allocation7] sm:$0xf]
    %v120 = vlaneseq
    %v121 = vshrl.u32 %v120, 7
    %v122 = vsub.s32 0, %v121
    %v123 = vrot.slane %v118, %v122
    %v124 = vlaneseq
    %v125 = vshrl.u32 %v124, 7
    %v126 = vsub.s32 1, %v125
    %v127 = vrot.slane %v118, %v126
    %v128 = vlaneseq
    %v129 = vshrl.u32 %v128, 7
    %v130 = vsub.s32 2, %v129
    %v131 = vrot.slane %v118, %v130
    %v132 = vlaneseq
    %v133 = vshrl.u32 %v132, 7
    %v134 = vsub.s32 3, %v133
    %v135 = vrot.slane %v118, %v134
    %v144 = vunpack.c.l.b16 %v114
    %v145 = vunpack.c.h.b16 %v114
    %v146 = vunpack.c.l.b16 %v115
    %v147 = vunpack.c.h.b16 %v115
    %v148 = vunpack.c.l.b16 %v116
    %v149 = vunpack.c.h.b16 %v116
    %v150 = vunpack.c.l.b16 %v117
    %v151 = vunpack.c.h.b16 %v117
    %v152 = vpack.c.b16 %v148, %v144
    %v153 = vpack.c.b16 %v149, %v145
    %v154 = vpack.c.b16 %v150, %v146
    %v155 = vpack.c.b16 %v151, %v147
    %vm156 = vcmask 97280
    %v158 = vsel %vm156, %v113, 0
    %vm160 = vcmask 1045504
    %v162 = vsel %vm160, %v152, 0
    %v165 = vsel %vm160, %v153, 0
    %v168 = vsel %vm160, %v154, 0
    %v171 = vsel %vm160, %v155, 0
    %173 = vmatprep.subr.bf16.mxu0 0
    %174 = vmatpush1.bf16.msra.mxu0 0
    %175 = vmatprep.subr.bf16.mxu0 0
    %176 = vmatpush1.bf16.msra.mxu0 0
    %177 = vmatprep.subr.bf16.mxu0 0
    %178 = vmatpush1.bf16.msra.mxu0 0
    %179 = vmatprep.subr.bf16.mxu0 0
    %180 = vmatpush1.bf16.msra.mxu0 0
    %181 = vmatprep.subr.bf16.mxu0 0
    %182 = vmatpush1.bf16.msra.mxu0 0
    %183 = vmatprep.subr.bf16.mxu0 0
    %184 = vmatpush1.bf16.msra.mxu0 0
    %185 = vmatprep.subr.bf16.mxu0 0
    %186 = vmatpush1.bf16.msra.mxu0 0
    %187 = vmatprep.subr.bf16.mxu0 %v165
    %188 = vmatpush1.bf16.msra.mxu0 %v162
    %189 = vmatprep.subr.bf16.mxu0 0
    %190 = vmatpush2.bf16.msra.mxu0 0
    %191 = vmatprep.subr.bf16.mxu0 0
    %192 = vmatpush2.bf16.msra.mxu0 0
    %193 = vmatprep.subr.bf16.mxu0 0
    %194 = vmatpush2.bf16.msra.mxu0 0
    %195 = vmatprep.subr.bf16.mxu0 0
    %196 = vmatpush2.bf16.msra.mxu0 0
    %197 = vmatprep.subr.bf16.mxu0 0
    %198 = vmatpush2.bf16.msra.mxu0 0
    %199 = vmatprep.subr.bf16.mxu0 0
    %200 = vmatpush2.bf16.msra.mxu0 0
    %201 = vmatprep.subr.bf16.mxu0 0
    %202 = vmatpush2.bf16.msra.mxu0 0
    %203 = vmatprep.subr.bf16.mxu0 0
    %204 = vmatpush2.bf16.msra.mxu0 0
    %205 = vmatprep.mubr.bf16.mxu0 0
    %206 = vmatmul.mubr.bf16.gmra.mxu0 %v158
    %v207 = vpop.f32.mrf.mxu0
    %v208 = vadd.f32 %v123, %v207
    %v209 = vpop.f32.mrf.mxu0
    %v210 = vadd.f32 %v127, %v209
    %v211 = vpop.f32.mrf.mxu0
    %v212 = vpop.f32.mrf.mxu0
    %213 = vdwg.mxu0
    %214 = vmatprep.subr.bf16.mxu0 0
    %215 = vmatpush1.bf16.msra.mxu0 0
    %216 = vmatprep.subr.bf16.mxu0 0
    %217 = vmatpush1.bf16.msra.mxu0 0
    %218 = vmatprep.subr.bf16.mxu0 0
    %219 = vmatpush1.bf16.msra.mxu0 0
    %220 = vmatprep.subr.bf16.mxu0 0
    %221 = vmatpush1.bf16.msra.mxu0 0
    %222 = vmatprep.subr.bf16.mxu0 0
    %223 = vmatpush1.bf16.msra.mxu0 0
    %224 = vmatprep.subr.bf16.mxu0 0
    %225 = vmatpush1.bf16.msra.mxu0 0
    %226 = vmatprep.subr.bf16.mxu0 0
    %227 = vmatpush1.bf16.msra.mxu0 0
    %228 = vmatprep.subr.bf16.mxu0 %v171
    %229 = vmatpush1.bf16.msra.mxu0 %v168
    %230 = vmatprep.subr.bf16.mxu0 0
    %231 = vmatpush2.bf16.msra.mxu0 0
    %232 = vmatprep.subr.bf16.mxu0 0
    %233 = vmatpush2.bf16.msra.mxu0 0
    %234 = vmatprep.subr.bf16.mxu0 0
    %235 = vmatpush2.bf16.msra.mxu0 0
    %236 = vmatprep.subr.bf16.mxu0 0
    %237 = vmatpush2.bf16.msra.mxu0 0
    %238 = vmatprep.subr.bf16.mxu0 0
    %239 = vmatpush2.bf16.msra.mxu0 0
    %240 = vmatprep.subr.bf16.mxu0 0
    %241 = vmatpush2.bf16.msra.mxu0 0
    %242 = vmatprep.subr.bf16.mxu0 0
    %243 = vmatpush2.bf16.msra.mxu0 0
    %244 = vmatprep.subr.bf16.mxu0 0
    %245 = vmatpush2.bf16.msra.mxu0 0
    %246 = vmatprep.mubr.bf16.mxu0 0
    %247 = vmatmul.mubr.bf16.gmra.mxu0 %v158
    %v248 = vpop.f32.mrf.mxu0
    %v249 = vadd.f32 %v131, %v248
    %v250 = vpop.f32.mrf.mxu0
    %v251 = vadd.f32 %v135, %v250
    %v252 = vpop.f32.mrf.mxu0
    %v253 = vpop.f32.mrf.mxu0
    %254 = vdwg.mxu0
    %v255 = vmax.f32 %v208, 0.0
    %v256 = vmax.f32 %v210, 0.0
    %v257 = vmax.f32 %v249, 0.0
    %v258 = vmax.f32 %v251, 0.0
    %v259 = vpack.c.bf16 %v255, %v255
    %v260 = vpack.c.bf16 %v256, %v256
    %v261 = vpack.c.bf16 %v257, %v257
    %v262 = vpack.c.bf16 %v258, %v258
    %v263 = vld [vmem:[#allocation8] sm:$0xf]
    %v264 = vld [vmem:[#allocation8 + $0x4] sm:$0xf]
    %v265 = vld [vmem:[#allocation8 + $0x8] sm:$0xf]
    %v266 = vld [vmem:[#allocation8 + $0xc] sm:$0xf]
    %v267 = vld [vmem:[#allocation8 + $0x10] sm:$0xf]
    %v268 = vld [vmem:[#allocation8 + $0x14] sm:$0xf]
    %v269 = vld [vmem:[#allocation8 + $0x18] sm:$0xf]
    %v270 = vld [vmem:[#allocation8 + $0x1c] sm:$0xf]
    %v271 = vld [vmem:[#allocation8 + $0x20] sm:$0xf]
    %v272 = vld [vmem:[#allocation8 + $0x24] sm:$0xf]
    %v273 = vld [vmem:[#allocation8 + $0x28] sm:$0xf]
    %v274 = vld [vmem:[#allocation8 + $0x2c] sm:$0xf]
    %v275 = vld [vmem:[#allocation8 + $0x30] sm:$0xf]
    %v276 = vld [vmem:[#allocation8 + $0x34] sm:$0xf]
    %v277 = vld [vmem:[#allocation8 + $0x38] sm:$0xf]
    %v278 = vld [vmem:[#allocation8 + $0x3c] sm:$0xf]
    %v279 = vld [vmem:[#allocation8 + $0x40] sm:$0xf]
    %v280 = vld [vmem:[#allocation8 + $0x44] sm:$0xf]
    %v281 = vld [vmem:[#allocation8 + $0x48] sm:$0xf]
    %v282 = vld [vmem:[#allocation8 + $0x4c] sm:$0xf]
    %v283 = vld [vmem:[#allocation8 + $0x50] sm:$0xf]
    %v284 = vld [vmem:[#allocation8 + $0x54] sm:$0xf]
    %v285 = vld [vmem:[#allocation8 + $0x58] sm:$0xf]
    %v286 = vld [vmem:[#allocation8 + $0x5c] sm:$0xf]
    %v287 = vld [vmem:[#allocation8 + $0x60] sm:$0xf]
    %v288 = vld [vmem:[#allocation8 + $0x64] sm:$0xf]
    %v289 = vld [vmem:[#allocation8 + $0x68] sm:$0xf]
    %v290 = vld [vmem:[#allocation8 + $0x6c] sm:$0xf]
    %v291 = vld [vmem:[#allocation8 + $0x70] sm:$0xf]
    %v292 = vld [vmem:[#allocation8 + $0x74] sm:$0xf]
    %v293 = vld [vmem:[#allocation8 + $0x78] sm:$0xf]
    %v294 = vld [vmem:[#allocation8 + $0x7c] sm:$0xf]
    %v295 = vld [vmem:[#allocation8 + $0x80] sm:$0xf]
    %v296 = vld [vmem:[#allocation8 + $0x84] sm:$0xf]
    %v297 = vld [vmem:[#allocation8 + $0x88] sm:$0xf]
    %v298 = vld [vmem:[#allocation8 + $0x8c] sm:$0xf]
    %v299 = vld [vmem:[#allocation8 + $0x90] sm:$0xf]
    %v300 = vld [vmem:[#allocation8 + $0x94] sm:$0xf]
    %v301 = vld [vmem:[#allocation8 + $0x98] sm:$0xf]
    %v302 = vld [vmem:[#allocation8 + $0x9c] sm:$0xf]
    %v303 = vld [vmem:[#allocation8 + $0xa0] sm:$0xf]
    %v304 = vld [vmem:[#allocation8 + $0xa4] sm:$0xf]
    %v305 = vld [vmem:[#allocation8 + $0xa8] sm:$0xf]
    %v306 = vld [vmem:[#allocation8 + $0xac] sm:$0xf]
    %v307 = vld [vmem:[#allocation8 + $0xb0] sm:$0xf]
    %v308 = vld [vmem:[#allocation8 + $0xb4] sm:$0xf]
    %v309 = vld [vmem:[#allocation8 + $0xb8] sm:$0xf]
    %v310 = vld [vmem:[#allocation8 + $0xbc] sm:$0xf]
    %v311 = vld [vmem:[#allocation8 + $0xc0] sm:$0xf]
    %v312 = vld [vmem:[#allocation8 + $0xc4] sm:$0xf]
    %v313 = vld [vmem:[#allocation8 + $0xc8] sm:$0xf]
    %v314 = vld [vmem:[#allocation8 + $0xcc] sm:$0xf]
    %v315 = vld [vmem:[#allocation8 + $0xd0] sm:$0xf]
    %v316 = vld [vmem:[#allocation8 + $0xd4] sm:$0xf]
    %v317 = vld [vmem:[#allocation8 + $0xd8] sm:$0xf]
    %v318 = vld [vmem:[#allocation8 + $0xdc] sm:$0xf]
    %v319 = vld [vmem:[#allocation8 + $0xe0] sm:$0xf]
    %v320 = vld [vmem:[#allocation8 + $0xe4] sm:$0xf]
    %v321 = vld [vmem:[#allocation8 + $0xe8] sm:$0xf]
    %v322 = vld [vmem:[#allocation8 + $0xec] sm:$0xf]
    %v323 = vld [vmem:[#allocation8 + $0xf0] sm:$0xf]
    %v324 = vld [vmem:[#allocation8 + $0xf4] sm:$0xf]
    %v325 = vld [vmem:[#allocation8 + $0xf8] sm:$0xf]
    %v326 = vld [vmem:[#allocation8 + $0xfc] sm:$0xf]
    %v327 = vld [vmem:[%s4] sm:$0x1]
    %v329 = vlaneseq
    %v330 = vshrl.u32 %v329, 7
    %v331 = vsub.s32 0, %v330
    %v332 = vrot.slane %v327, %v331
    %v398 = vunpack.c.l.b16 %v263
    %v399 = vunpack.c.l.b16 %v264
    %v400 = vunpack.c.l.b16 %v265
    %v401 = vunpack.c.l.b16 %v266
    %v402 = vunpack.c.l.b16 %v267
    %v403 = vunpack.c.l.b16 %v268
    %v404 = vunpack.c.l.b16 %v269
    %v405 = vunpack.c.l.b16 %v270
    %v406 = vunpack.c.l.b16 %v271
    %v407 = vunpack.c.l.b16 %v272
    %v408 = vunpack.c.l.b16 %v273
    %v409 = vunpack.c.l.b16 %v274
    %v410 = vunpack.c.l.b16 %v275
    %v411 = vunpack.c.l.b16 %v276
    %v412 = vunpack.c.l.b16 %v277
    %v413 = vunpack.c.l.b16 %v278
    %v414 = vunpack.c.l.b16 %v279
    %v415 = vunpack.c.l.b16 %v280
    %v416 = vunpack.c.l.b16 %v281
    %v417 = vunpack.c.l.b16 %v282
    %v418 = vunpack.c.l.b16 %v283
    %v419 = vunpack.c.l.b16 %v284
    %v420 = vunpack.c.l.b16 %v285
    %v421 = vunpack.c.l.b16 %v286
    %v422 = vunpack.c.l.b16 %v287
    %v423 = vunpack.c.l.b16 %v288
    %v424 = vunpack.c.l.b16 %v289
    %v425 = vunpack.c.l.b16 %v290
    %v426 = vunpack.c.l.b16 %v291
    %v427 = vunpack.c.l.b16 %v292
    %v428 = vunpack.c.l.b16 %v293
    %v429 = vunpack.c.l.b16 %v294
    %v430 = vunpack.c.l.b16 %v295
    %v431 = vunpack.c.l.b16 %v296
    %v432 = vunpack.c.l.b16 %v297
    %v433 = vunpack.c.l.b16 %v298
    %v434 = vunpack.c.l.b16 %v299
    %v435 = vunpack.c.l.b16 %v300
    %v436 = vunpack.c.l.b16 %v301
    %v437 = vunpack.c.l.b16 %v302
    %v438 = vunpack.c.l.b16 %v303
    %v439 = vunpack.c.l.b16 %v304
    %v440 = vunpack.c.l.b16 %v305
    %v441 = vunpack.c.l.b16 %v306
    %v442 = vunpack.c.l.b16 %v307
    %v443 = vunpack.c.l.b16 %v308
    %v444 = vunpack.c.l.b16 %v309
    %v445 = vunpack.c.l.b16 %v310
    %v446 = vunpack.c.l.b16 %v311
    %v447 = vunpack.c.l.b16 %v312
    %v448 = vunpack.c.l.b16 %v313
    %v449 = vunpack.c.l.b16 %v314
    %v450 = vunpack.c.l.b16 %v315
    %v451 = vunpack.c.l.b16 %v316
    %v452 = vunpack.c.l.b16 %v317
    %v453 = vunpack.c.l.b16 %v318
    %v454 = vunpack.c.l.b16 %v319
    %v455 = vunpack.c.l.b16 %v320
    %v456 = vunpack.c.l.b16 %v321
    %v457 = vunpack.c.l.b16 %v322
    %v458 = vunpack.c.l.b16 %v323
    %v459 = vunpack.c.l.b16 %v324
    %v460 = vunpack.c.l.b16 %v325
    %v461 = vunpack.c.l.b16 %v326
    %v462 = vpack.c.b16 %v399, %v398
    %v463 = vpack.c.b16 %v401, %v400
    %v464 = vpack.c.b16 %v403, %v402
    %v465 = vpack.c.b16 %v405, %v404
    %v466 = vpack.c.b16 %v407, %v406
    %v467 = vpack.c.b16 %v409, %v408
    %v468 = vpack.c.b16 %v411, %v410
    %v469 = vpack.c.b16 %v413, %v412
    %v470 = vpack.c.b16 %v415, %v414
    %v471 = vpack.c.b16 %v417, %v416
    %v472 = vpack.c.b16 %v419, %v418
    %v473 = vpack.c.b16 %v421, %v420
    %v474 = vpack.c.b16 %v423, %v422
    %v475 = vpack.c.b16 %v425, %v424
    %v476 = vpack.c.b16 %v427, %v426
    %v477 = vpack.c.b16 %v429, %v428
    %v478 = vpack.c.b16 %v431, %v430
    %v479 = vpack.c.b16 %v433, %v432
    %v480 = vpack.c.b16 %v435, %v434
    %v481 = vpack.c.b16 %v437, %v436
    %v482 = vpack.c.b16 %v439, %v438
    %v483 = vpack.c.b16 %v441, %v440
    %v484 = vpack.c.b16 %v443, %v442
    %v485 = vpack.c.b16 %v445, %v444
    %v486 = vpack.c.b16 %v447, %v446
    %v487 = vpack.c.b16 %v449, %v448
    %v488 = vpack.c.b16 %v451, %v450
    %v489 = vpack.c.b16 %v453, %v452
    %v490 = vpack.c.b16 %v455, %v454
    %v491 = vpack.c.b16 %v457, %v456
    %v492 = vpack.c.b16 %v459, %v458
    %v493 = vpack.c.b16 %v461, %v460
    %526 = vmatprep.subr.bf16.mxu0 0
    %527 = vmatpush1.bf16.msra.mxu0 %v469
    %528 = vmatprep.subr.bf16.mxu0 0
    %529 = vmatpush1.bf16.msra.mxu0 %v468
    %530 = vmatprep.subr.bf16.mxu0 0
    %531 = vmatpush1.bf16.msra.mxu0 %v467
    %532 = vmatprep.subr.bf16.mxu0 0
    %533 = vmatpush1.bf16.msra.mxu0 %v466
    %534 = vmatprep.subr.bf16.mxu0 0
    %535 = vmatpush1.bf16.msra.mxu0 %v465
    %536 = vmatprep.subr.bf16.mxu0 0
    %537 = vmatpush1.bf16.msra.mxu0 %v464
    %538 = vmatprep.subr.bf16.mxu0 0
    %539 = vmatpush1.bf16.msra.mxu0 %v463
    %540 = vmatprep.subr.bf16.mxu0 0
    %541 = vmatpush1.bf16.msra.mxu0 %v462
    %542 = vmatprep.subr.bf16.mxu0 0
    %543 = vmatpush2.bf16.msra.mxu0 %v477
    %544 = vmatprep.subr.bf16.mxu0 0
    %545 = vmatpush2.bf16.msra.mxu0 %v476
    %546 = vmatprep.subr.bf16.mxu0 0
    %547 = vmatpush2.bf16.msra.mxu0 %v475
    %548 = vmatprep.subr.bf16.mxu0 0
    %549 = vmatpush2.bf16.msra.mxu0 %v474
    %550 = vmatprep.subr.bf16.mxu0 0
    %551 = vmatpush2.bf16.msra.mxu0 %v473
    %552 = vmatprep.subr.bf16.mxu0 0
    %553 = vmatpush2.bf16.msra.mxu0 %v472
    %554 = vmatprep.subr.bf16.mxu0 0
    %555 = vmatpush2.bf16.msra.mxu0 %v471
    %556 = vmatprep.subr.bf16.mxu0 0
    %557 = vmatpush2.bf16.msra.mxu0 %v470
    %558 = vmatprep.mubr.bf16.mxu0 %v260
    %559 = vmatmul.mubr.bf16.gmra.mxu0 %v259
    %v560 = vpop.f32.mrf.mxu0
    %v561 = vadd.f32 %v332, %v560
    %v562 = vpop.f32.mrf.mxu0
    %v563 = vpop.f32.mrf.mxu0
    %v564 = vpop.f32.mrf.mxu0
    %565 = vdwg.mxu0
    %566 = vmatprep.subr.bf16.mxu0 0
    %567 = vmatpush1.bf16.msra.mxu0 %v485
    %568 = vmatprep.subr.bf16.mxu0 0
    %569 = vmatpush1.bf16.msra.mxu0 %v484
    %570 = vmatprep.subr.bf16.mxu0 0
    %571 = vmatpush1.bf16.msra.mxu0 %v483
    %572 = vmatprep.subr.bf16.mxu0 0
    %573 = vmatpush1.bf16.msra.mxu0 %v482
    %574 = vmatprep.subr.bf16.mxu0 0
    %575 = vmatpush1.bf16.msra.mxu0 %v481
    %576 = vmatprep.subr.bf16.mxu0 0
    %577 = vmatpush1.bf16.msra.mxu0 %v480
    %578 = vmatprep.subr.bf16.mxu0 0
    %579 = vmatpush1.bf16.msra.mxu0 %v479
    %580 = vmatprep.subr.bf16.mxu0 0
    %581 = vmatpush1.bf16.msra.mxu0 %v478
    %582 = vmatprep.subr.bf16.mxu0 0
    %583 = vmatpush2.bf16.msra.mxu0 %v493
    %584 = vmatprep.subr.bf16.mxu0 0
    %585 = vmatpush2.bf16.msra.mxu0 %v492
    %586 = vmatprep.subr.bf16.mxu0 0
    %587 = vmatpush2.bf16.msra.mxu0 %v491
    %588 = vmatprep.subr.bf16.mxu0 0
    %589 = vmatpush2.bf16.msra.mxu0 %v490
    %590 = vmatprep.subr.bf16.mxu0 0
    %591 = vmatpush2.bf16.msra.mxu0 %v489
    %592 = vmatprep.subr.bf16.mxu0 0
    %593 = vmatpush2.bf16.msra.mxu0 %v488
    %594 = vmatprep.subr.bf16.mxu0 0
    %595 = vmatpush2.bf16.msra.mxu0 %v487
    %596 = vmatprep.subr.bf16.mxu0 0
    %597 = vmatpush2.bf16.msra.mxu0 %v486
    %598 = vmatprep.mubr.bf16.mxu0 %v262
    %599 = vmatmul.mubr.bf16.gmra.mxu0 %v261
    %v600 = vpop.f32.mrf.mxu0
    %v601 = vadd.f32 %v561, %v600
    %v602 = vpop.f32.mrf.mxu0
    %v603 = vpop.f32.mrf.mxu0
    %v604 = vpop.f32.mrf.mxu0
    %605 = vdwg.mxu0
    %v606 = vmax.f32 %v601, 0.0
    %v607 = vpack.c.bf16 %v606, %v606
    %v608 = vld [vmem:[#allocation10] sm:$0xf]
    %v609 = vld [vmem:[#allocation10 + $0x4] sm:$0xf]
    %v610 = vld [vmem:[#allocation10 + $0x8] sm:$0xf]
    %v611 = vld [vmem:[#allocation10 + $0xc] sm:$0xf]
    %v612 = vld [vmem:[#allocation10 + $0x10] sm:$0xf]
    %v613 = vld [vmem:[#allocation10 + $0x14] sm:$0xf]
    %v614 = vld [vmem:[#allocation10 + $0x18] sm:$0xf]
    %v615 = vld [vmem:[#allocation10 + $0x1c] sm:$0xf]
    %v616 = vld [vmem:[#allocation10 + $0x20] sm:$0xf]
    %v617 = vld [vmem:[#allocation10 + $0x24] sm:$0xf]
    %v618 = vld [vmem:[#allocation10 + $0x28] sm:$0xf]
    %v619 = vld [vmem:[#allocation10 + $0x2c] sm:$0xf]
    %v620 = vld [vmem:[#allocation10 + $0x30] sm:$0xf]
    %v621 = vld [vmem:[#allocation10 + $0x34] sm:$0xf]
    %v622 = vld [vmem:[#allocation10 + $0x38] sm:$0xf]
    %v623 = vld [vmem:[#allocation10 + $0x3c] sm:$0xf]
    %v624 = vld [vmem:[%s6] sm:$0x1]
    %v626 = vlaneseq
    %v627 = vshrl.u32 %v626, 7
    %v628 = vsub.s32 0, %v627
    %v629 = vrot.slane %v624, %v628
    %v647 = vunpack.c.l.b16 %v608
    %v648 = vunpack.c.l.b16 %v609
    %v649 = vunpack.c.l.b16 %v610
    %v650 = vunpack.c.l.b16 %v611
    %v651 = vunpack.c.l.b16 %v612
    %v652 = vunpack.c.l.b16 %v613
    %v653 = vunpack.c.l.b16 %v614
    %v654 = vunpack.c.l.b16 %v615
    %v655 = vunpack.c.l.b16 %v616
    %v656 = vunpack.c.l.b16 %v617
    %v657 = vunpack.c.l.b16 %v618
    %v658 = vunpack.c.l.b16 %v619
    %v659 = vunpack.c.l.b16 %v620
    %v660 = vunpack.c.l.b16 %v621
    %v661 = vunpack.c.l.b16 %v622
    %v662 = vunpack.c.l.b16 %v623
    %v663 = vpack.c.b16 %v648, %v647
    %v664 = vpack.c.b16 %v650, %v649
    %v665 = vpack.c.b16 %v652, %v651
    %v666 = vpack.c.b16 %v654, %v653
    %v667 = vpack.c.b16 %v656, %v655
    %v668 = vpack.c.b16 %v658, %v657
    %v669 = vpack.c.b16 %v660, %v659
    %v670 = vpack.c.b16 %v662, %v661
    %679 = vmatprep.subr.bf16.mxu0 0
    %680 = vmatpush1.bf16.msra.mxu0 %v670
    %681 = vmatprep.subr.bf16.mxu0 0
    %682 = vmatpush1.bf16.msra.mxu0 %v669
    %683 = vmatprep.subr.bf16.mxu0 0
    %684 = vmatpush1.bf16.msra.mxu0 %v668
    %685 = vmatprep.subr.bf16.mxu0 0
    %686 = vmatpush1.bf16.msra.mxu0 %v667
    %687 = vmatprep.subr.bf16.mxu0 0
    %688 = vmatpush1.bf16.msra.mxu0 %v666
    %689 = vmatprep.subr.bf16.mxu0 0
    %690 = vmatpush1.bf16.msra.mxu0 %v665
    %691 = vmatprep.subr.bf16.mxu0 0
    %692 = vmatpush1.bf16.msra.mxu0 %v664
    %693 = vmatprep.subr.bf16.mxu0 0
    %694 = vmatpush1.bf16.msra.mxu0 %v663
    %695 = vmatprep.subr.bf16.mxu0 0
    %696 = vmatpush2.bf16.msra.mxu0 0
    %697 = vmatprep.subr.bf16.mxu0 0
    %698 = vmatpush2.bf16.msra.mxu0 0
    %699 = vmatprep.subr.bf16.mxu0 0
    %700 = vmatpush2.bf16.msra.mxu0 0
    %701 = vmatprep.subr.bf16.mxu0 0
    %702 = vmatpush2.bf16.msra.mxu0 0
    %703 = vmatprep.subr.bf16.mxu0 0
    %704 = vmatpush2.bf16.msra.mxu0 0
    %705 = vmatprep.subr.bf16.mxu0 0
    %706 = vmatpush2.bf16.msra.mxu0 0
    %707 = vmatprep.subr.bf16.mxu0 0
    %708 = vmatpush2.bf16.msra.mxu0 0
    %709 = vmatprep.subr.bf16.mxu0 0
    %710 = vmatpush2.bf16.msra.mxu0 0
    %711 = vmatprep.mubr.bf16.mxu0 0
    %712 = vmatmul.mubr.bf16.gmra.mxu0 %v607
    %v713 = vpop.f32.mrf.mxu0
    %v714 = vadd.f32 %v629, %v713
    %v715 = vpop.f32.mrf.mxu0
    %v716 = vpop.f32.mrf.mxu0
    %v717 = vpop.f32.mrf.mxu0
    %718 = vdwg.mxu0
    %v719 = vmax.f32 %v714, 0.0
    %v720 = vpack.c.bf16 %v719, %v719
    %v721 = vld [vmem:[#allocation11] sm:$0xf]
    %v722 = vld [vmem:[#allocation11 + $0x4] sm:$0xf]
    %v723 = vld [vmem:[#allocation11 + $0x8] sm:$0xf]
    %v724 = vld [vmem:[#allocation11 + $0xc] sm:$0xf]
    %v725 = vld [vmem:[#allocation11 + $0x10] sm:$0xf]
    %v726 = vld [vmem:[#allocation11 + $0x14] sm:$0xf]
    %v727 = vld [vmem:[#allocation11 + $0x18] sm:$0xf]
    %v728 = vld [vmem:[#allocation11 + $0x1c] sm:$0xf]
    %v729 = vld [vmem:[#allocation11 + $0x20] sm:$0xf]
    %v730 = vld [vmem:[#allocation11 + $0x24] sm:$0xf]
    %v731 = vld [vmem:[#allocation11 + $0x28] sm:$0xf]
    %v732 = vld [vmem:[#allocation11 + $0x2c] sm:$0xf]
    %v733 = vld [vmem:[#allocation11 + $0x30] sm:$0xf]
    %v734 = vld [vmem:[#allocation11 + $0x34] sm:$0xf]
    %v735 = vld [vmem:[#allocation11 + $0x38] sm:$0xf]
    %v736 = vld [vmem:[#allocation11 + $0x3c] sm:$0xf]
    %v737 = vld [vmem:[%s8] sm:$0x1]
    %v739 = vlaneseq
    %v740 = vshrl.u32 %v739, 7
    %v741 = vsub.s32 0, %v740
    %v742 = vrot.slane %v737, %v741
    %v760 = vunpack.c.l.b16 %v721
    %v761 = vunpack.c.l.b16 %v722
    %v762 = vunpack.c.l.b16 %v723
    %v763 = vunpack.c.l.b16 %v724
    %v764 = vunpack.c.l.b16 %v725
    %v765 = vunpack.c.l.b16 %v726
    %v766 = vunpack.c.l.b16 %v727
    %v767 = vunpack.c.l.b16 %v728
    %v768 = vunpack.c.l.b16 %v729
    %v769 = vunpack.c.l.b16 %v730
    %v770 = vunpack.c.l.b16 %v731
    %v771 = vunpack.c.l.b16 %v732
    %v772 = vunpack.c.l.b16 %v733
    %v773 = vunpack.c.l.b16 %v734
    %v774 = vunpack.c.l.b16 %v735
    %v775 = vunpack.c.l.b16 %v736
    %v776 = vpack.c.b16 %v761, %v760
    %v777 = vpack.c.b16 %v763, %v762
    %v778 = vpack.c.b16 %v765, %v764
    %v779 = vpack.c.b16 %v767, %v766
    %v780 = vpack.c.b16 %v769, %v768
    %v781 = vpack.c.b16 %v771, %v770
    %v782 = vpack.c.b16 %v773, %v772
    %v783 = vpack.c.b16 %v775, %v774
    %792 = vmatprep.subr.bf16.mxu0 0
    %793 = vmatpush1.bf16.msra.mxu0 %v783
    %794 = vmatprep.subr.bf16.mxu0 0
    %795 = vmatpush1.bf16.msra.mxu0 %v782
    %796 = vmatprep.subr.bf16.mxu0 0
    %797 = vmatpush1.bf16.msra.mxu0 %v781
    %798 = vmatprep.subr.bf16.mxu0 0
    %799 = vmatpush1.bf16.msra.mxu0 %v780
    %800 = vmatprep.subr.bf16.mxu0 0
    %801 = vmatpush1.bf16.msra.mxu0 %v779
    %802 = vmatprep.subr.bf16.mxu0 0
    %803 = vmatpush1.bf16.msra.mxu0 %v778
    %804 = vmatprep.subr.bf16.mxu0 0
    %805 = vmatpush1.bf16.msra.mxu0 %v777
    %806 = vmatprep.subr.bf16.mxu0 0
    %807 = vmatpush1.bf16.msra.mxu0 %v776
    %808 = vmatprep.subr.bf16.mxu0 0
    %809 = vmatpush2.bf16.msra.mxu0 0
    %810 = vmatprep.subr.bf16.mxu0 0
    %811 = vmatpush2.bf16.msra.mxu0 0
    %812 = vmatprep.subr.bf16.mxu0 0
    %813 = vmatpush2.bf16.msra.mxu0 0
    %814 = vmatprep.subr.bf16.mxu0 0
    %815 = vmatpush2.bf16.msra.mxu0 0
    %816 = vmatprep.subr.bf16.mxu0 0
    %817 = vmatpush2.bf16.msra.mxu0 0
    %818 = vmatprep.subr.bf16.mxu0 0
    %819 = vmatpush2.bf16.msra.mxu0 0
    %820 = vmatprep.subr.bf16.mxu0 0
    %821 = vmatpush2.bf16.msra.mxu0 0
    %822 = vmatprep.subr.bf16.mxu0 0
    %823 = vmatpush2.bf16.msra.mxu0 0
    %824 = vmatprep.mubr.bf16.mxu0 0
    %825 = vmatmul.mubr.bf16.gmra.mxu0 %v720
    %v826 = vpop.f32.mrf.mxu0
    %v827 = vadd.f32 %v742, %v826
    %v828 = vpop.f32.mrf.mxu0
    %v829 = vpop.f32.mrf.mxu0
    %v830 = vpop.f32.mrf.mxu0
    %831 = vdwg.mxu0
    %v832 = vpack.c.bf16 %v827, %v827
    %833 = vst [vmem:[#allocation13] sm:$0xf] %v832
    // Predicated region
    $region62: #{tpu_custom_call.1} parent=1 // pred_check
      _
    $region63: #{tpu_custom_call.1} parent=1 // pred_check_branch
      %835 = sbr.rel (0) target = $region65
    $region64: #{tpu_custom_call.1} parent=1 // pred_region
      %s837 = ssub.s32 64, 64
      %838 = vsyncadd [#allocation4], %s837
      %s840 = sshll.u32 [#allocation13], 4
      %s841 = int_to_ptr.vmem [resolvable:$true] %s840
      %843 = dma.vmem_to_hbm [thread:$0]  %s841, 64, %s9, [#allocation4]
    $region65: #{tpu_custom_call.1} parent=1 // pred_fallthru
      _
    // Predicated region
    $region66: #{tpu_custom_call.1} parent=1 // pred_check
      _
    $region67: #{tpu_custom_call.1} parent=1 // pred_check_branch
      %845 = sbr.rel (0) target = $region69
    $region68: #{tpu_custom_call.1} parent=1 // pred_region
      %846 = dma.done [#allocation4], 64
    $region69: #{tpu_custom_call.1} parent=1 // pred_fallthru
      _
    %847 = vsyncpa [#allocation3], 1
    %848 = vsyncpa [#allocation6], 1
    %849 = vsyncpa [#allocation9], 1
    %850 = vsyncpa [#allocation12], 1
    %851 = vsyncpa [#allocation4], 1

</llo_original>
